<compile_context>
chip_gen: v5e
topology: v5e:2x2
jax: 0.10.0
libtpu: 0.0.40
codegen_flags: <defaults>
</compile_context>

<pallas_src>
import math

import jax
import jax.numpy as jnp
from jax.experimental import pallas as pl
from jax.experimental.pallas import tpu as pltpu


# --------------------------------- kernel ---------------------------------
def decoder_layer_kernel(x_ref, wqkv_ref, bqkv_ref, wo_ref, bo_ref,
                         w1_ref, b1_ref, w2_ref, b2_ref, out_ref):
    # Load weights once (shared across the static batch unroll below).
    wqkv = wqkv_ref[...]          # (3H, D, d_k)  per-head fused Q/K/V weights (in, out_h)
    bqkv = bqkv_ref[...]          # (3H, 1, d_k)
    wo = wo_ref[...]              # (H, d_k, D)   per-head output projection
    bo = bo_ref[...]              # (1, D)
    w1 = w1_ref[...]              # (D, Hp)  zero-padded MLP weights (lane-dense hidden)
    b1 = b1_ref[...]              # (1, Hp)
    w2 = w2_ref[...]              # (Hp, D)
    b2 = b2_ref[...]              # (1, D)

    num_heads = wqkv.shape[0] // 3
    d_k = wqkv.shape[-1]
    inv_sqrt_dk = 1.0 / math.sqrt(d_k)

    def standardise(t):
        # torch Standardisation: mean / unbiased std over the sequence axis, no eps.
        mean = jnp.mean(t, axis=0, keepdims=True)
        var = jnp.sum((t - mean) ** 2, axis=0, keepdims=True) * (1.0 / (t.shape[0] - 1))
        return (t - mean) * jax.lax.rsqrt(var)          # EUP rsqrt, not a VALU divide

    # Static unroll over the batch elements in this block (1 when batch is on the grid).
    for b in range(x_ref.shape[0]):
        x = x_ref[b].astype(jnp.float32)                # (S, D)

        # ---- sublayer 1: standardise -> multi-head attention -> residual ----
        scaled = standardise(x)
        xb = jnp.broadcast_to(scaled, (3 * num_heads,) + scaled.shape)   # (3H, S, D)
        # Head-batched fused Q/K/V projection: output is already head-major, no relayout.
        qkv = jnp.einsum("gsd,gde->gse", xb, wqkv,
                         preferred_element_type=jnp.float32) + bqkv      # (3H, S, d_k)
        q = qkv[0:num_heads]                                             # (H, S, d_k)
        k = qkv[num_heads:2 * num_heads]                                 # (H, S, d_k)
        v = qkv[2 * num_heads:3 * num_heads]                             # (H, S, d_k)

        s = jnp.einsum("hqd,hkd->hqk", q, k,
                       preferred_element_type=jnp.float32) * inv_sqrt_dk  # (H, S, S)
        m = jnp.max(s, axis=-1, keepdims=True)
        e = jnp.exp(s - m)
        denom = jnp.sum(e, axis=-1, keepdims=True)
        p = e * pl.reciprocal(denom, approx=True)        # EUP reciprocal; dropout = identity
        ctx = jnp.einsum("hqk,hkd->hqd", p, v,
                         preferred_element_type=jnp.float32)              # (H, S, d_k)

        # Head-batched output projection; heads are reduced over the leading axis,
        # so they never need to be concatenated back into lanes.
        o = jnp.einsum("hsd,hde->hse", ctx, wo,
                       preferred_element_type=jnp.float32)                # (H, S, D)
        attn = jnp.sum(o, axis=0) + bo                                    # (S, D)
        x1 = x + attn                                    # dropout = identity (eval)

        # ---- sublayer 2: standardise -> MLP -> residual ----
        s2 = standardise(x1)
        h1 = jnp.maximum(jnp.dot(s2, w1, preferred_element_type=jnp.float32) + b1, 0.0)
        mlp = jnp.dot(h1, w2, preferred_element_type=jnp.float32) + b2    # padded rows are 0
        out_ref[b] = (x1 + mlp).astype(out_ref.dtype)    # dropout = identity (eval)


# ------------------------- one-time parameter packing -------------------------
def pack_decoder_params(params, num_heads):
    """Host-side layout plumbing, done ONCE at init (not per forward call)."""
    D = params["wq"].shape[0]
    d_k = D // num_heads
    hidden = params["w1"].shape[0]
    hidden_p = ((hidden + 127) // 128) * 128             # lane-dense MLP hidden (100 -> 128)

    def heads_in(w):  # torch (out, in) Linear weight -> (H, in, d_k) per-head (in, out_h)
        return jnp.transpose(w, (1, 0)).reshape(D, num_heads, d_k).transpose(1, 0, 2)

    wqkv = jnp.concatenate([heads_in(params["wq"]),
                            heads_in(params["wk"]),
                            heads_in(params["wv"])], axis=0)                  # (3H, D, d_k)
    bqkv = jnp.concatenate([params["bq"].reshape(num_heads, 1, d_k),
                            params["bk"].reshape(num_heads, 1, d_k),
                            params["bv"].reshape(num_heads, 1, d_k)], axis=0)  # (3H, 1, d_k)
    wo = jnp.transpose(params["wo"], (1, 0)).reshape(num_heads, d_k, D)       # (H, d_k, D)
    w1 = jnp.zeros((D, hidden_p), jnp.float32).at[:, :hidden].set(params["w1"].T)
    b1 = jnp.zeros((1, hidden_p), jnp.float32).at[:, :hidden].set(params["b1"])
    w2 = jnp.zeros((hidden_p, D), jnp.float32).at[:hidden, :].set(params["w2"].T)
    return {"wqkv": wqkv, "bqkv": bqkv, "wo": wo, "bo": params["bo"],
            "w1": w1, "b1": b1, "w2": w2, "b2": params["b2"]}


def _multi_tensorcore():
    """True if the chip exposes 2 TensorCores (v4 / v7x class); best-effort heuristic."""
    try:
        kind = jax.devices()[0].device_kind.lower()
    except Exception:
        return False
    return ("v7" in kind) or ("7x" in kind) or ("v4" in kind)


# --------------------------------- wrapper ---------------------------------
def decoder_layer(x, packed, *, batch_grid=None):
    B, S, D = x.shape
    if batch_grid is None:
        batch_grid = _multi_tensorcore() and B > 1

    operands = (x, packed["wqkv"], packed["bqkv"], packed["wo"], packed["bo"],
                packed["w1"], packed["b1"], packed["w2"], packed["b2"])

    if batch_grid:
        # v7x / v4: shard the batch axis across the two TensorCores.
        def whole(a):
            nd = a.ndim
            return pl.BlockSpec(a.shape, lambda b, _nd=nd: (0,) * _nd)

        in_specs = [pl.BlockSpec((1, S, D), lambda b: (b, 0, 0))]
        in_specs += [whole(a) for a in operands[1:]]
        return pl.pallas_call(
            decoder_layer_kernel,
            out_shape=jax.ShapeDtypeStruct((B, S, D), x.dtype),
            grid=(B,),
            in_specs=in_specs,
            out_specs=pl.BlockSpec((1, S, D), lambda b: (b, 0, 0)),
            compiler_params=pltpu.CompilerParams(dimension_semantics=("parallel",)),
        )(*operands)

    # v5e / v6e: no grid at all -> whole problem (<1 MiB) resident in VMEM, straight-line body.
    return pl.pallas_call(
        decoder_layer_kernel,
        out_shape=jax.ShapeDtypeStruct((B, S, D), x.dtype),
    )(*operands)


# ----------------------- pure-JAX reference (for validation) -----------------------
def _ref_standardise(x):
    mean = jnp.mean(x, axis=1, keepdims=True)
    std = jnp.std(x, axis=1, keepdims=True, ddof=1)
    return (x - mean) / std


def decoder_layer_ref(x, params, num_heads):
    B, S, D = x.shape
    d_k = D // num_heads

    def attn(s):
        q = s @ params["wq"].T + params["bq"]
        k = s @ params["wk"].T + params["bk"]
        v = s @ params["wv"].T + params["bv"]
        q = q.reshape(B, S, num_heads, d_k).transpose(0, 2, 1, 3)
        k = k.reshape(B, S, num_heads, d_k).transpose(0, 2, 1, 3)
        v = v.reshape(B, S, num_heads, d_k).transpose(0, 2, 1, 3)
        a = jnp.einsum("bhqd,bhkd->bhqk", q, k) / math.sqrt(d_k)
        a = jax.nn.softmax(a, axis=-1)
        o = jnp.einsum("bhqk,bhkd->bhqd", a, v).transpose(0, 2, 1, 3).reshape(B, S, D)
        return o @ params["wo"].T + params["bo"]

    def mlp(s):
        h = jax.nn.relu(s @ params["w1"].T + params["b1"])
        return h @ params["w2"].T + params["b2"]

    x = x + attn(_ref_standardise(x))
    x = x + mlp(_ref_standardise(x))
    return x


# ----------------------------------- main -----------------------------------
def _init_linear(key, out_dim, in_dim):
    kw, kb = jax.random.split(key)
    bound = 1.0 / math.sqrt(in_dim)
    w = jax.random.uniform(kw, (out_dim, in_dim), jnp.float32, -bound, bound)
    b = jax.random.uniform(kb, (1, out_dim), jnp.float32, -bound, bound)
    return w, b


if __name__ == "__main__":
    B, S, D = 2, 8, 32
    NUM_HEADS = 4
    HIDDEN = 100  # MLP(d_model, hiden=100)

    key = jax.random.PRNGKey(0)
    kx, kq, kk, kv, ko, k1, k2 = jax.random.split(key, 7)

    x = jax.random.normal(kx, (B, S, D), jnp.float32)

    params = {}
    params["wq"], params["bq"] = _init_linear(kq, D, D)
    params["wk"], params["bk"] = _init_linear(kk, D, D)
    params["wv"], params["bv"] = _init_linear(kv, D, D)
    params["wo"], params["bo"] = _init_linear(ko, D, D)
    params["w1"], params["b1"] = _init_linear(k1, HIDDEN, D)
    params["w2"], params["b2"] = _init_linear(k2, D, HIDDEN)

    packed = pack_decoder_params(params, NUM_HEADS)     # one-time host-side repacking

    out = decoder_layer(x, packed)
    out = jax.block_until_ready(out)

    ref = decoder_layer_ref(x, params, NUM_HEADS)
    assert out.shape == (B, S, D)
    assert jnp.allclose(out, ref, rtol=1e-3, atol=1e-3), "mismatch vs pure-JAX reference"

    print("KERNEL_OK")
</pallas_src>

<mosaic_0001>
module attributes {stable_mosaic.version = 11 : i64} {
  func.func @decoder_layer_kernel(%arg0: memref<2x8x32xf32, #tpu.memory_space<vmem>>, %arg1: memref<12x32x8xf32, #tpu.memory_space<vmem>>, %arg2: memref<12x1x8xf32, #tpu.memory_space<vmem>>, %arg3: memref<4x8x32xf32, #tpu.memory_space<vmem>>, %arg4: memref<1x32xf32, #tpu.memory_space<vmem>>, %arg5: memref<32x128xf32, #tpu.memory_space<vmem>>, %arg6: memref<1x128xf32, #tpu.memory_space<vmem>>, %arg7: memref<128x32xf32, #tpu.memory_space<vmem>>, %arg8: memref<1x32xf32, #tpu.memory_space<vmem>>, %arg9: memref<2x8x32xf32, #tpu.memory_space<vmem>>) attributes {dimension_semantics = [], scalar_prefetch = 0 : i64, scratch_operands = 0 : i64, tpu.core_type = #tpu.core_type<tc>} {
    %c0 = arith.constant 0 : index
    %c0_0 = arith.constant 0 : index
    %c0_1 = arith.constant 0 : index
    %0 = vector.load %arg1[%c0, %c0_0, %c0_1] : memref<12x32x8xf32, #tpu.memory_space<vmem>>, vector<12x32x8xf32>
    %c0_2 = arith.constant 0 : index
    %c0_3 = arith.constant 0 : index
    %c0_4 = arith.constant 0 : index
    %1 = vector.load %arg2[%c0_2, %c0_3, %c0_4] : memref<12x1x8xf32, #tpu.memory_space<vmem>>, vector<12x1x8xf32>
    %c0_5 = arith.constant 0 : index
    %c0_6 = arith.constant 0 : index
    %c0_7 = arith.constant 0 : index
    %2 = vector.load %arg3[%c0_5, %c0_6, %c0_7] : memref<4x8x32xf32, #tpu.memory_space<vmem>>, vector<4x8x32xf32>
    %c0_8 = arith.constant 0 : index
    %c0_9 = arith.constant 0 : index
    %3 = vector.load %arg4[%c0_8, %c0_9] : memref<1x32xf32, #tpu.memory_space<vmem>>, vector<1x32xf32>
    %c0_10 = arith.constant 0 : index
    %c0_11 = arith.constant 0 : index
    %4 = vector.load %arg5[%c0_10, %c0_11] : memref<32x128xf32, #tpu.memory_space<vmem>>, vector<32x128xf32>
    %c0_12 = arith.constant 0 : index
    %c0_13 = arith.constant 0 : index
    %5 = vector.load %arg6[%c0_12, %c0_13] : memref<1x128xf32, #tpu.memory_space<vmem>>, vector<1x128xf32>
    %c0_14 = arith.constant 0 : index
    %c0_15 = arith.constant 0 : index
    %6 = vector.load %arg7[%c0_14, %c0_15] : memref<128x32xf32, #tpu.memory_space<vmem>>, vector<128x32xf32>
    %c0_16 = arith.constant 0 : index
    %c0_17 = arith.constant 0 : index
    %7 = vector.load %arg8[%c0_16, %c0_17] : memref<1x32xf32, #tpu.memory_space<vmem>>, vector<1x32xf32>
    %c0_18 = arith.constant 0 : index
    %c0_19 = arith.constant 0 : index
    %c0_20 = arith.constant 0 : index
    %8 = vector.load %arg0[%c0_18, %c0_19, %c0_20] : memref<2x8x32xf32, #tpu.memory_space<vmem>>, vector<1x8x32xf32>
    %9 = vector.shape_cast %8 : vector<1x8x32xf32> to vector<8x32xf32>
    %cst = arith.constant dense<0.000000e+00> : vector<32xf32>
    %10 = vector.multi_reduction <add>, %9, %cst [0] : vector<8x32xf32> to vector<32xf32>
    %11 = vector.shape_cast %10 : vector<32xf32> to vector<1x32xf32>
    %cst_21 = arith.constant 8.000000e+00 : f32
    %12 = vector.broadcast %cst_21 : f32 to vector<1x32xf32>
    %13 = arith.divf %11, %12 : vector<1x32xf32>
    %14 = vector.broadcast %13 : vector<1x32xf32> to vector<8x32xf32>
    %15 = arith.subf %9, %14 : vector<8x32xf32>
    %16 = arith.mulf %15, %15 : vector<8x32xf32>
    %cst_22 = arith.constant dense<0.000000e+00> : vector<32xf32>
    %17 = vector.multi_reduction <add>, %16, %cst_22 [0] : vector<8x32xf32> to vector<32xf32>
    %18 = vector.shape_cast %17 : vector<32xf32> to vector<1x32xf32>
    %cst_23 = arith.constant 0.142857149 : f32
    %19 = vector.broadcast %cst_23 : f32 to vector<1x32xf32>
    %20 = arith.mulf %18, %19 : vector<1x32xf32>
    %21 = vector.broadcast %13 : vector<1x32xf32> to vector<8x32xf32>
    %22 = arith.subf %9, %21 : vector<8x32xf32>
    %23 = math.rsqrt %20 : vector<1x32xf32>
    %24 = vector.broadcast %23 : vector<1x32xf32> to vector<8x32xf32>
    %25 = arith.mulf %22, %24 : vector<8x32xf32>
    %26 = vector.shape_cast %25 : vector<8x32xf32> to vector<1x8x32xf32>
    %27 = vector.broadcast %26 : vector<1x8x32xf32> to vector<12x8x32xf32>
    "tpu.trace_start"() <{level = 10 : i32, message = "gsd,gde->gse"}> : () -> ()
    %cst_24 = arith.constant dense<0.000000e+00> : vector<12x8x8xf32>
    %28 = tpu.matmul %27, %0, %cst_24 {dimension_numbers = #tpu.dot_dimension_numbers<[2], [1], [1], [2], [0, 0, 0, 1, 1, 2], [0], [0]>} : vector<12x8x32xf32>, vector<12x32x8xf32>, vector<12x8x8xf32> -> vector<12x8x8xf32>
    "tpu.trace_stop"() : () -> ()
    %29 = vector.broadcast %1 : vector<12x1x8xf32> to vector<12x8x8xf32>
    %30 = arith.addf %28, %29 : vector<12x8x8xf32>
    %31 = vector.extract_strided_slice %30 {offsets = [0, 0, 0], sizes = [4, 8, 8], strides = [1, 1, 1]} : vector<12x8x8xf32> to vector<4x8x8xf32>
    %32 = vector.extract_strided_slice %30 {offsets = [4, 0, 0], sizes = [4, 8, 8], strides = [1, 1, 1]} : vector<12x8x8xf32> to vector<4x8x8xf32>
    %33 = vector.extract_strided_slice %30 {offsets = [8, 0, 0], sizes = [4, 8, 8], strides = [1, 1, 1]} : vector<12x8x8xf32> to vector<4x8x8xf32>
    "tpu.trace_start"() <{level = 10 : i32, message = "hqd,hkd->hqk"}> : () -> ()
    %cst_25 = arith.constant dense<0.000000e+00> : vector<4x8x8xf32>
    %34 = tpu.matmul %31, %32, %cst_25 {dimension_numbers = #tpu.dot_dimension_numbers<[2], [2], [1], [1], [0, 0, 0, 1, 1, 1], [0], [0]>} : vector<4x8x8xf32>, vector<4x8x8xf32>, vector<4x8x8xf32> -> vector<4x8x8xf32>
    "tpu.trace_stop"() : () -> ()
    %cst_26 = arith.constant 0.353553385 : f32
    %35 = vector.broadcast %cst_26 : f32 to vector<4x8x8xf32>
    %36 = arith.mulf %34, %35 : vector<4x8x8xf32>
    %cst_27 = arith.constant dense<0xFF800000> : vector<4x8xf32>
    %37 = vector.multi_reduction <maximumf>, %36, %cst_27 [2] : vector<4x8x8xf32> to vector<4x8xf32>
    %38 = vector.shape_cast %37 : vector<4x8xf32> to vector<4x8x1xf32>
    %39 = vector.broadcast %38 : vector<4x8x1xf32> to vector<4x8x8xf32>
    %40 = arith.subf %36, %39 : vector<4x8x8xf32>
    %41 = math.exp %40 : vector<4x8x8xf32>
    %cst_28 = arith.constant dense<0.000000e+00> : vector<4x8xf32>
    %42 = vector.multi_reduction <add>, %41, %cst_28 [2] : vector<4x8x8xf32> to vector<4x8xf32>
    %43 = vector.shape_cast %42 : vector<4x8xf32> to vector<4x8x1xf32>
    %44 = tpu.reciprocal %43 {approx = true} : vector<4x8x1xf32> -> vector<4x8x1xf32>
    %45 = vector.broadcast %44 : vector<4x8x1xf32> to vector<4x8x8xf32>
    %46 = arith.mulf %41, %45 : vector<4x8x8xf32>
    "tpu.trace_start"() <{level = 10 : i32, message = "hqk,hkd->hqd"}> : () -> ()
    %cst_29 = arith.constant dense<0.000000e+00> : vector<4x8x8xf32>
    %47 = tpu.matmul %46, %33, %cst_29 {dimension_numbers = #tpu.dot_dimension_numbers<[2], [1], [1], [2], [0, 0, 0, 1, 1, 2], [0], [0]>} : vector<4x8x8xf32>, vector<4x8x8xf32>, vector<4x8x8xf32> -> vector<4x8x8xf32>
    "tpu.trace_stop"() : () -> ()
    "tpu.trace_start"() <{level = 10 : i32, message = "hsd,hde->hse"}> : () -> ()
    %cst_30 = arith.constant dense<0.000000e+00> : vector<4x8x32xf32>
    %48 = tpu.matmul %47, %2, %cst_30 {dimension_numbers = #tpu.dot_dimension_numbers<[2], [1], [1], [2], [0, 0, 0, 1, 1, 2], [0], [0]>} : vector<4x8x8xf32>, vector<4x8x32xf32>, vector<4x8x32xf32> -> vector<4x8x32xf32>
    "tpu.trace_stop"() : () -> ()
    %cst_31 = arith.constant dense<0.000000e+00> : vector<8x32xf32>
    %49 = vector.multi_reduction <add>, %48, %cst_31 [0] : vector<4x8x32xf32> to vector<8x32xf32>
    %50 = vector.broadcast %3 : vector<1x32xf32> to vector<8x32xf32>
    %51 = arith.addf %49, %50 : vector<8x32xf32>
    %52 = arith.addf %9, %51 : vector<8x32xf32>
    %cst_32 = arith.constant dense<0.000000e+00> : vector<32xf32>
    %53 = vector.multi_reduction <add>, %52, %cst_32 [0] : vector<8x32xf32> to vector<32xf32>
    %54 = vector.shape_cast %53 : vector<32xf32> to vector<1x32xf32>
    %cst_33 = arith.constant 8.000000e+00 : f32
    %55 = vector.broadcast %cst_33 : f32 to vector<1x32xf32>
    %56 = arith.divf %54, %55 : vector<1x32xf32>
    %57 = vector.broadcast %56 : vector<1x32xf32> to vector<8x32xf32>
    %58 = arith.subf %52, %57 : vector<8x32xf32>
    %59 = arith.mulf %58, %58 : vector<8x32xf32>
    %cst_34 = arith.constant dense<0.000000e+00> : vector<32xf32>
    %60 = vector.multi_reduction <add>, %59, %cst_34 [0] : vector<8x32xf32> to vector<32xf32>
    %61 = vector.shape_cast %60 : vector<32xf32> to vector<1x32xf32>
    %cst_35 = arith.constant 0.142857149 : f32
    %62 = vector.broadcast %cst_35 : f32 to vector<1x32xf32>
    %63 = arith.mulf %61, %62 : vector<1x32xf32>
    %64 = vector.broadcast %56 : vector<1x32xf32> to vector<8x32xf32>
    %65 = arith.subf %52, %64 : vector<8x32xf32>
    %66 = math.rsqrt %63 : vector<1x32xf32>
    %67 = vector.broadcast %66 : vector<1x32xf32> to vector<8x32xf32>
    %68 = arith.mulf %65, %67 : vector<8x32xf32>
    %cst_36 = arith.constant dense<0.000000e+00> : vector<8x128xf32>
    %69 = tpu.matmul %68, %4, %cst_36 {dimension_numbers = #tpu.dot_dimension_numbers<[1], [0], [0], [1], [0, 0, 1, 1], [], []>} : vector<8x32xf32>, vector<32x128xf32>, vector<8x128xf32> -> vector<8x128xf32>
    %70 = vector.broadcast %5 : vector<1x128xf32> to vector<8x128xf32>
    %71 = arith.addf %69, %70 : vector<8x128xf32>
    %cst_37 = arith.constant 0.000000e+00 : f32
    %72 = vector.broadcast %cst_37 : f32 to vector<8x128xf32>
    %73 = arith.maximumf %71, %72 : vector<8x128xf32>
    %cst_38 = arith.constant dense<0.000000e+00> : vector<8x32xf32>
    %74 = tpu.matmul %73, %6, %cst_38 {dimension_numbers = #tpu.dot_dimension_numbers<[1], [0], [0], [1], [0, 0, 1, 1], [], []>} : vector<8x128xf32>, vector<128x32xf32>, vector<8x32xf32> -> vector<8x32xf32>
    %75 = vector.broadcast %7 : vector<1x32xf32> to vector<8x32xf32>
    %76 = arith.addf %74, %75 : vector<8x32xf32>
    %77 = arith.addf %52, %76 : vector<8x32xf32>
    %c0_39 = arith.constant 0 : index
    %c0_40 = arith.constant 0 : index
    %c0_41 = arith.constant 0 : index
    %78 = vector.load %arg9[%c0_39, %c0_40, %c0_41] : memref<2x8x32xf32, #tpu.memory_space<vmem>>, vector<1x8x32xf32>
    %79 = vector.shape_cast %78 : vector<1x8x32xf32> to vector<8x32xf32>
    %80 = vector.shape_cast %77 : vector<8x32xf32> to vector<1x8x32xf32>
    tpu.vector_store %arg9[%c0_39, %c0_40, %c0_41], %80 {strides = array<i32>} : memref<2x8x32xf32, #tpu.memory_space<vmem>>, vector<1x8x32xf32>,
    %c1 = arith.constant 1 : index
    %c0_42 = arith.constant 0 : index
    %c0_43 = arith.constant 0 : index
    %81 = vector.load %arg0[%c1, %c0_42, %c0_43] : memref<2x8x32xf32, #tpu.memory_space<vmem>>, vector<1x8x32xf32>
    %82 = vector.shape_cast %81 : vector<1x8x32xf32> to vector<8x32xf32>
    %cst_44 = arith.constant dense<0.000000e+00> : vector<32xf32>
    %83 = vector.multi_reduction <add>, %82, %cst_44 [0] : vector<8x32xf32> to vector<32xf32>
    %84 = vector.shape_cast %83 : vector<32xf32> to vector<1x32xf32>
    %cst_45 = arith.constant 8.000000e+00 : f32
    %85 = vector.broadcast %cst_45 : f32 to vector<1x32xf32>
    %86 = arith.divf %84, %85 : vector<1x32xf32>
    %87 = vector.broadcast %86 : vector<1x32xf32> to vector<8x32xf32>
    %88 = arith.subf %82, %87 : vector<8x32xf32>
    %89 = arith.mulf %88, %88 : vector<8x32xf32>
    %cst_46 = arith.constant dense<0.000000e+00> : vector<32xf32>
    %90 = vector.multi_reduction <add>, %89, %cst_46 [0] : vector<8x32xf32> to vector<32xf32>
    %91 = vector.shape_cast %90 : vector<32xf32> to vector<1x32xf32>
    %cst_47 = arith.constant 0.142857149 : f32
    %92 = vector.broadcast %cst_47 : f32 to vector<1x32xf32>
    %93 = arith.mulf %91, %92 : vector<1x32xf32>
    %94 = vector.broadcast %86 : vector<1x32xf32> to vector<8x32xf32>
    %95 = arith.subf %82, %94 : vector<8x32xf32>
    %96 = math.rsqrt %93 : vector<1x32xf32>
    %97 = vector.broadcast %96 : vector<1x32xf32> to vector<8x32xf32>
    %98 = arith.mulf %95, %97 : vector<8x32xf32>
    %99 = vector.shape_cast %98 : vector<8x32xf32> to vector<1x8x32xf32>
    %100 = vector.broadcast %99 : vector<1x8x32xf32> to vector<12x8x32xf32>
    "tpu.trace_start"() <{level = 10 : i32, message = "gsd,gde->gse"}> : () -> ()
    %cst_48 = arith.constant dense<0.000000e+00> : vector<12x8x8xf32>
    %101 = tpu.matmul %100, %0, %cst_48 {dimension_numbers = #tpu.dot_dimension_numbers<[2], [1], [1], [2], [0, 0, 0, 1, 1, 2], [0], [0]>} : vector<12x8x32xf32>, vector<12x32x8xf32>, vector<12x8x8xf32> -> vector<12x8x8xf32>
    "tpu.trace_stop"() : () -> ()
    %102 = vector.broadcast %1 : vector<12x1x8xf32> to vector<12x8x8xf32>
    %103 = arith.addf %101, %102 : vector<12x8x8xf32>
    %104 = vector.extract_strided_slice %103 {offsets = [0, 0, 0], sizes = [4, 8, 8], strides = [1, 1, 1]} : vector<12x8x8xf32> to vector<4x8x8xf32>
    %105 = vector.extract_strided_slice %103 {offsets = [4, 0, 0], sizes = [4, 8, 8], strides = [1, 1, 1]} : vector<12x8x8xf32> to vector<4x8x8xf32>
    %106 = vector.extract_strided_slice %103 {offsets = [8, 0, 0], sizes = [4, 8, 8], strides = [1, 1, 1]} : vector<12x8x8xf32> to vector<4x8x8xf32>
    "tpu.trace_start"() <{level = 10 : i32, message = "hqd,hkd->hqk"}> : () -> ()
    %cst_49 = arith.constant dense<0.000000e+00> : vector<4x8x8xf32>
    %107 = tpu.matmul %104, %105, %cst_49 {dimension_numbers = #tpu.dot_dimension_numbers<[2], [2], [1], [1], [0, 0, 0, 1, 1, 1], [0], [0]>} : vector<4x8x8xf32>, vector<4x8x8xf32>, vector<4x8x8xf32> -> vector<4x8x8xf32>
    "tpu.trace_stop"() : () -> ()
    %cst_50 = arith.constant 0.353553385 : f32
    %108 = vector.broadcast %cst_50 : f32 to vector<4x8x8xf32>
    %109 = arith.mulf %107, %108 : vector<4x8x8xf32>
    %cst_51 = arith.constant dense<0xFF800000> : vector<4x8xf32>
    %110 = vector.multi_reduction <maximumf>, %109, %cst_51 [2] : vector<4x8x8xf32> to vector<4x8xf32>
    %111 = vector.shape_cast %110 : vector<4x8xf32> to vector<4x8x1xf32>
    %112 = vector.broadcast %111 : vector<4x8x1xf32> to vector<4x8x8xf32>
    %113 = arith.subf %109, %112 : vector<4x8x8xf32>
    %114 = math.exp %113 : vector<4x8x8xf32>
    %cst_52 = arith.constant dense<0.000000e+00> : vector<4x8xf32>
    %115 = vector.multi_reduction <add>, %114, %cst_52 [2] : vector<4x8x8xf32> to vector<4x8xf32>
    %116 = vector.shape_cast %115 : vector<4x8xf32> to vector<4x8x1xf32>
    %117 = tpu.reciprocal %116 {approx = true} : vector<4x8x1xf32> -> vector<4x8x1xf32>
    %118 = vector.broadcast %117 : vector<4x8x1xf32> to vector<4x8x8xf32>
    %119 = arith.mulf %114, %118 : vector<4x8x8xf32>
    "tpu.trace_start"() <{level = 10 : i32, message = "hqk,hkd->hqd"}> : () -> ()
    %cst_53 = arith.constant dense<0.000000e+00> : vector<4x8x8xf32>
    %120 = tpu.matmul %119, %106, %cst_53 {dimension_numbers = #tpu.dot_dimension_numbers<[2], [1], [1], [2], [0, 0, 0, 1, 1, 2], [0], [0]>} : vector<4x8x8xf32>, vector<4x8x8xf32>, vector<4x8x8xf32> -> vector<4x8x8xf32>
    "tpu.trace_stop"() : () -> ()
    "tpu.trace_start"() <{level = 10 : i32, message = "hsd,hde->hse"}> : () -> ()
    %cst_54 = arith.constant dense<0.000000e+00> : vector<4x8x32xf32>
    %121 = tpu.matmul %120, %2, %cst_54 {dimension_numbers = #tpu.dot_dimension_numbers<[2], [1], [1], [2], [0, 0, 0, 1, 1, 2], [0], [0]>} : vector<4x8x8xf32>, vector<4x8x32xf32>, vector<4x8x32xf32> -> vector<4x8x32xf32>
    "tpu.trace_stop"() : () -> ()
    %cst_55 = arith.constant dense<0.000000e+00> : vector<8x32xf32>
    %122 = vector.multi_reduction <add>, %121, %cst_55 [0] : vector<4x8x32xf32> to vector<8x32xf32>
    %123 = vector.broadcast %3 : vector<1x32xf32> to vector<8x32xf32>
    %124 = arith.addf %122, %123 : vector<8x32xf32>
    %125 = arith.addf %82, %124 : vector<8x32xf32>
    %cst_56 = arith.constant dense<0.000000e+00> : vector<32xf32>
    %126 = vector.multi_reduction <add>, %125, %cst_56 [0] : vector<8x32xf32> to vector<32xf32>
    %127 = vector.shape_cast %126 : vector<32xf32> to vector<1x32xf32>
    %cst_57 = arith.constant 8.000000e+00 : f32
    %128 = vector.broadcast %cst_57 : f32 to vector<1x32xf32>
    %129 = arith.divf %127, %128 : vector<1x32xf32>
    %130 = vector.broadcast %129 : vector<1x32xf32> to vector<8x32xf32>
    %131 = arith.subf %125, %130 : vector<8x32xf32>
    %132 = arith.mulf %131, %131 : vector<8x32xf32>
    %cst_58 = arith.constant dense<0.000000e+00> : vector<32xf32>
    %133 = vector.multi_reduction <add>, %132, %cst_58 [0] : vector<8x32xf32> to vector<32xf32>
    %134 = vector.shape_cast %133 : vector<32xf32> to vector<1x32xf32>
    %cst_59 = arith.constant 0.142857149 : f32
    %135 = vector.broadcast %cst_59 : f32 to vector<1x32xf32>
    %136 = arith.mulf %134, %135 : vector<1x32xf32>
    %137 = vector.broadcast %129 : vector<1x32xf32> to vector<8x32xf32>
    %138 = arith.subf %125, %137 : vector<8x32xf32>
    %139 = math.rsqrt %136 : vector<1x32xf32>
    %140 = vector.broadcast %139 : vector<1x32xf32> to vector<8x32xf32>
    %141 = arith.mulf %138, %140 : vector<8x32xf32>
    %cst_60 = arith.constant dense<0.000000e+00> : vector<8x128xf32>
    %142 = tpu.matmul %141, %4, %cst_60 {dimension_numbers = #tpu.dot_dimension_numbers<[1], [0], [0], [1], [0, 0, 1, 1], [], []>} : vector<8x32xf32>, vector<32x128xf32>, vector<8x128xf32> -> vector<8x128xf32>
    %143 = vector.broadcast %5 : vector<1x128xf32> to vector<8x128xf32>
    %144 = arith.addf %142, %143 : vector<8x128xf32>
    %cst_61 = arith.constant 0.000000e+00 : f32
    %145 = vector.broadcast %cst_61 : f32 to vector<8x128xf32>
    %146 = arith.maximumf %144, %145 : vector<8x128xf32>
    %cst_62 = arith.constant dense<0.000000e+00> : vector<8x32xf32>
    %147 = tpu.matmul %146, %6, %cst_62 {dimension_numbers = #tpu.dot_dimension_numbers<[1], [0], [0], [1], [0, 0, 1, 1], [], []>} : vector<8x128xf32>, vector<128x32xf32>, vector<8x32xf32> -> vector<8x32xf32>
    %148 = vector.broadcast %7 : vector<1x32xf32> to vector<8x32xf32>
    %149 = arith.addf %147, %148 : vector<8x32xf32>
    %150 = arith.addf %125, %149 : vector<8x32xf32>
    %c1_63 = arith.constant 1 : index
    %c0_64 = arith.constant 0 : index
    %c0_65 = arith.constant 0 : index
    %151 = vector.load %arg9[%c1_63, %c0_64, %c0_65] : memref<2x8x32xf32, #tpu.memory_space<vmem>>, vector<1x8x32xf32>
    %152 = vector.shape_cast %151 : vector<1x8x32xf32> to vector<8x32xf32>
    %153 = vector.shape_cast %150 : vector<8x32xf32> to vector<1x8x32xf32>
    tpu.vector_store %arg9[%c1_63, %c0_64, %c0_65], %153 {strides = array<i32>} : memref<2x8x32xf32, #tpu.memory_space<vmem>>, vector<1x8x32xf32>,
    return
  }
}

</mosaic_0001>

<llo_original>
// kernel: tpu_custom_call.1
$region0: #{tpu_custom_call.1}
  #allocation0 [shape = 'u32[]', space=smem, size = 0x4, offset = 0x4, fixed_abs, tag = 'smem constant byte address 0x4 - core index']
  #allocation1 [shape = 'u32[72,128]{1,0:T(1,128)}', space=vmem, size = 0x9000, scoped, tag = 'internal scratch']
  %s0 = inlined_call_operand.vmem [shape: f32[2,8,32], index: 0, kind: input, shape index: {}]
  %s1 = inlined_call_operand.vmem [shape: f32[12,32,8], index: 1, kind: input, shape index: {}]
  %s2 = inlined_call_operand.vmem [shape: f32[12,1,8], index: 2, kind: input, shape index: {}]
  %s3 = inlined_call_operand.vmem [shape: f32[4,8,32], index: 3, kind: input, shape index: {}]
  %s4 = inlined_call_operand.vmem [shape: f32[1,32], index: 4, kind: input, shape index: {}]
  %s5 = inlined_call_operand.vmem [shape: f32[32,128], index: 5, kind: input, shape index: {}]
  %s6 = inlined_call_operand.vmem [shape: f32[1,128], index: 6, kind: input, shape index: {}]
  %s7 = inlined_call_operand.vmem [shape: f32[128,32], index: 7, kind: input, shape index: {}]
  %s8 = inlined_call_operand.vmem [shape: f32[1,32], index: 8, kind: input, shape index: {}]
  %s9 = inlined_call_operand.hbm [shape: f32[2,8,32], index: 9, kind: output, shape index: {}]
  %s10 = sld [smem:[#allocation0]]
  $region46: #{tpu_custom_call.1} parent=0
    _
  %s12 = ssub.s32 1, %s10
  %s13 = scalar_select 0, %s12, %s10
  $region1: #{tpu_custom_call.1} parent=0
    #allocation2 [shape = 'u8[8192]{0}', space=vmem, size = 0x2000, scoped, tag = 'output window, operand 0, single buffered']
    #allocation3 [shape = 's32[1]{0}', space=sflag, size = 0x4, scoped, tag = 'scoped memory for tpu_custom_call.1']
    %14 = vsyncpa [#allocation3], 0
    // Predicated region
    $region2: #{tpu_custom_call.1} parent=1 // pred_check
      _
    $region3: #{tpu_custom_call.1} parent=1 // pred_check_branch
      %16 = sbr.rel (0) target = $region5
    $region4: #{tpu_custom_call.1} parent=1 // pred_region
      _
    $region5: #{tpu_custom_call.1} parent=1 // pred_fallthru
      _
    // Predicated region
    $region6: #{tpu_custom_call.1} parent=1 // pred_check
      _
    $region7: #{tpu_custom_call.1} parent=1 // pred_check_branch
      %18 = sbr.rel (0) target = $region9
    $region8: #{tpu_custom_call.1} parent=1 // pred_region
      _
    $region9: #{tpu_custom_call.1} parent=1 // pred_fallthru
      _
    // Predicated region
    $region10: #{tpu_custom_call.1} parent=1 // pred_check
      _
    $region11: #{tpu_custom_call.1} parent=1 // pred_check_branch
      %20 = sbr.rel (0) target = $region13
    $region12: #{tpu_custom_call.1} parent=1 // pred_region
      _
    $region13: #{tpu_custom_call.1} parent=1 // pred_fallthru
      _
    // Predicated region
    $region14: #{tpu_custom_call.1} parent=1 // pred_check
      _
    $region15: #{tpu_custom_call.1} parent=1 // pred_check_branch
      %22 = sbr.rel (0) target = $region17
    $region16: #{tpu_custom_call.1} parent=1 // pred_region
      _
    $region17: #{tpu_custom_call.1} parent=1 // pred_fallthru
      _
    // Predicated region
    $region18: #{tpu_custom_call.1} parent=1 // pred_check
      _
    $region19: #{tpu_custom_call.1} parent=1 // pred_check_branch
      %24 = sbr.rel (0) target = $region21
    $region20: #{tpu_custom_call.1} parent=1 // pred_region
      _
    $region21: #{tpu_custom_call.1} parent=1 // pred_fallthru
      _
    // Predicated region
    $region22: #{tpu_custom_call.1} parent=1 // pred_check
      _
    $region23: #{tpu_custom_call.1} parent=1 // pred_check_branch
      %26 = sbr.rel (0) target = $region25
    $region24: #{tpu_custom_call.1} parent=1 // pred_region
      _
    $region25: #{tpu_custom_call.1} parent=1 // pred_fallthru
      _
    // Predicated region
    $region26: #{tpu_custom_call.1} parent=1 // pred_check
      _
    $region27: #{tpu_custom_call.1} parent=1 // pred_check_branch
      %28 = sbr.rel (0) target = $region29
    $region28: #{tpu_custom_call.1} parent=1 // pred_region
      _
    $region29: #{tpu_custom_call.1} parent=1 // pred_fallthru
      _
    // Predicated region
    $region30: #{tpu_custom_call.1} parent=1 // pred_check
      _
    $region31: #{tpu_custom_call.1} parent=1 // pred_check_branch
      %30 = sbr.rel (0) target = $region33
    $region32: #{tpu_custom_call.1} parent=1 // pred_region
      _
    $region33: #{tpu_custom_call.1} parent=1 // pred_fallthru
      _
    // Predicated region
    $region34: #{tpu_custom_call.1} parent=1 // pred_check
      _
    $region35: #{tpu_custom_call.1} parent=1 // pred_check_branch
      %32 = sbr.rel (0) target = $region37
    $region36: #{tpu_custom_call.1} parent=1 // pred_region
      _
    $region37: #{tpu_custom_call.1} parent=1 // pred_fallthru
      _
    %v33 = vld [vmem:[%s1] sm:$0xff]
    %v34 = vld [vmem:[%s1 + $0x8] sm:$0xff]
    %v35 = vld [vmem:[%s1 + $0x10] sm:$0xff]
    %v36 = vld [vmem:[%s1 + $0x18] sm:$0xff]
    %v37 = vld [vmem:[%s1 + $0x20] sm:$0xff]
    %v38 = vld [vmem:[%s1 + $0x28] sm:$0xff]
    %v39 = vld [vmem:[%s1 + $0x30] sm:$0xff]
    %v40 = vld [vmem:[%s1 + $0x38] sm:$0xff]
    %v41 = vld [vmem:[%s1 + $0x40] sm:$0xff]
    %v42 = vld [vmem:[%s1 + $0x48] sm:$0xff]
    %v43 = vld [vmem:[%s1 + $0x50] sm:$0xff]
    %v44 = vld [vmem:[%s1 + $0x58] sm:$0xff]
    %v45 = vld [vmem:[%s1 + $0x60] sm:$0xff]
    %v46 = vld [vmem:[%s1 + $0x68] sm:$0xff]
    %v47 = vld [vmem:[%s1 + $0x70] sm:$0xff]
    %v48 = vld [vmem:[%s1 + $0x78] sm:$0xff]
    %v49 = vld [vmem:[%s1 + $0x80] sm:$0xff]
    %v50 = vld [vmem:[%s1 + $0x88] sm:$0xff]
    %v51 = vld [vmem:[%s1 + $0x90] sm:$0xff]
    %v52 = vld [vmem:[%s1 + $0x98] sm:$0xff]
    %v53 = vld [vmem:[%s1 + $0xa0] sm:$0xff]
    %v54 = vld [vmem:[%s1 + $0xa8] sm:$0xff]
    %v55 = vld [vmem:[%s1 + $0xb0] sm:$0xff]
    %v56 = vld [vmem:[%s1 + $0xb8] sm:$0xff]
    %v57 = vld [vmem:[%s1 + $0xc0] sm:$0xff]
    %v58 = vld [vmem:[%s1 + $0xc8] sm:$0xff]
    %v59 = vld [vmem:[%s1 + $0xd0] sm:$0xff]
    %v60 = vld [vmem:[%s1 + $0xd8] sm:$0xff]
    %v61 = vld [vmem:[%s1 + $0xe0] sm:$0xff]
    %v62 = vld [vmem:[%s1 + $0xe8] sm:$0xff]
    %v63 = vld [vmem:[%s1 + $0xf0] sm:$0xff]
    %v64 = vld [vmem:[%s1 + $0xf8] sm:$0xff]
    %v65 = vld [vmem:[%s1 + $0x100] sm:$0xff]
    %v66 = vld [vmem:[%s1 + $0x108] sm:$0xff]
    %v67 = vld [vmem:[%s1 + $0x110] sm:$0xff]
    %v68 = vld [vmem:[%s1 + $0x118] sm:$0xff]
    %v69 = vld [vmem:[%s1 + $0x120] sm:$0xff]
    %v70 = vld [vmem:[%s1 + $0x128] sm:$0xff]
    %v71 = vld [vmem:[%s1 + $0x130] sm:$0xff]
    %v72 = vld [vmem:[%s1 + $0x138] sm:$0xff]
    %v73 = vld [vmem:[%s1 + $0x140] sm:$0xff]
    %v74 = vld [vmem:[%s1 + $0x148] sm:$0xff]
    %v75 = vld [vmem:[%s1 + $0x150] sm:$0xff]
    %v76 = vld [vmem:[%s1 + $0x158] sm:$0xff]
    %v77 = vld [vmem:[%s1 + $0x160] sm:$0xff]
    %v78 = vld [vmem:[%s1 + $0x168] sm:$0xff]
    %v79 = vld [vmem:[%s1 + $0x170] sm:$0xff]
    %v80 = vld [vmem:[%s1 + $0x178] sm:$0xff]
    %v81 = vld [vmem:[%s2] sm:$0x1]
    %v82 = vld [vmem:[%s2 + $0x1] sm:$0x1]
    %v83 = vld [vmem:[%s2 + $0x2] sm:$0x1]
    %v84 = vld [vmem:[%s2 + $0x3] sm:$0x1]
    %v85 = vld [vmem:[%s2 + $0x4] sm:$0x1]
    %v86 = vld [vmem:[%s2 + $0x5] sm:$0x1]
    %v87 = vld [vmem:[%s2 + $0x6] sm:$0x1]
    %v88 = vld [vmem:[%s2 + $0x7] sm:$0x1]
    %v89 = vld [vmem:[%s2 + $0x8] sm:$0x1]
    %v90 = vld [vmem:[%s2 + $0x9] sm:$0x1]
    %v91 = vld [vmem:[%s2 + $0xa] sm:$0x1]
    %v92 = vld [vmem:[%s2 + $0xb] sm:$0x1]
    %v93 = vld [vmem:[%s3] sm:$0xff]
    %v94 = vld [vmem:[%s3 + $0x8] sm:$0xff]
    %v95 = vld [vmem:[%s3 + $0x10] sm:$0xff]
    %v96 = vld [vmem:[%s3 + $0x18] sm:$0xff]
    %v97 = vld [vmem:[%s4] sm:$0x1]
    %v98 = vld [vmem:[%s5] sm:$0xff]
    %v99 = vld [vmem:[%s5 + $0x8] sm:$0xff]
    %v100 = vld [vmem:[%s5 + $0x10] sm:$0xff]
    %v101 = vld [vmem:[%s5 + $0x18] sm:$0xff]
    %v102 = vld [vmem:[%s6] sm:$0x1]
    %v103 = vld [vmem:[%s7] sm:$0xff]
    %v104 = vld [vmem:[%s7 + $0x8] sm:$0xff]
    %v105 = vld [vmem:[%s7 + $0x10] sm:$0xff]
    %v106 = vld [vmem:[%s7 + $0x18] sm:$0xff]
    %v107 = vld [vmem:[%s7 + $0x20] sm:$0xff]
    %v108 = vld [vmem:[%s7 + $0x28] sm:$0xff]
    %v109 = vld [vmem:[%s7 + $0x30] sm:$0xff]
    %v110 = vld [vmem:[%s7 + $0x38] sm:$0xff]
    %v111 = vld [vmem:[%s7 + $0x40] sm:$0xff]
    %v112 = vld [vmem:[%s7 + $0x48] sm:$0xff]
    %v113 = vld [vmem:[%s7 + $0x50] sm:$0xff]
    %v114 = vld [vmem:[%s7 + $0x58] sm:$0xff]
    %v115 = vld [vmem:[%s7 + $0x60] sm:$0xff]
    %v116 = vld [vmem:[%s7 + $0x68] sm:$0xff]
    %v117 = vld [vmem:[%s7 + $0x70] sm:$0xff]
    %v118 = vld [vmem:[%s7 + $0x78] sm:$0xff]
    %v119 = vld [vmem:[%s8] sm:$0x1]
    %v120 = vld [vmem:[%s0] sm:$0xff]
    %vm121 = vcmask 261120
    %v122 = vsel %vm121, %v120, 0.0
    %v123 = vrot.slane %v122, 4
    %v124 = vadd.f32 %v122, %v123
    %v125 = vrot.slane %v124, 2
    %v126 = vadd.f32 %v124, %v125
    %v127 = vrot.slane %v126, 1
    %v128 = vadd.f32 %v126, %v127
    %v129 = vrcp.pop 8.0
    %v130 = vmul.f32 8.0, %v129
    %v131 = vsub.f32 1.0, %v130
    %v132 = vmul.f32 %v129, %v131
    %v133 = vadd.f32 %v129, %v132
    %vm134 = vweird.f32 %v129
    %v135 = vsel %vm134, %v129, %v133
    %v136 = vmul.f32 %v128, %v135
    %v137 = vsub.f32 %v120, %v136
    %v138 = vmul.f32 %v137, %v137
    %v139 = vsel %vm121, %v138, 0.0
    %v140 = vrot.slane %v139, 4
    %v141 = vadd.f32 %v139, %v140
    %v142 = vrot.slane %v141, 2
    %v143 = vadd.f32 %v141, %v142
    %v144 = vrot.slane %v143, 1
    %v145 = vadd.f32 %v143, %v144
    %v146 = vmul.f32 %v145, 0.14285715
    %v147 = vrsqrt.pop %v146
    %v148 = vmul.f32 %v147, %v146
    %v149 = vmul.f32 %v148, %v147
    %v150 = vmul.f32 0.5, %v149
    %v151 = vsub.f32 1.5, %v150
    %v152 = vmul.f32 %v147, %v151
    %vm153 = vweird.f32 %v146
    %vm154 = vweird.f32 %v147
    %vm155 = vmor %vm153, %vm154
    %v156 = vsel %vm155, %v147, %v152
    %v157 = vmul.f32 %v137, %v156
    %v170 = vperm.slane %v81, 0
    %v171 = vperm.slane %v82, 0
    %v172 = vperm.slane %v83, 0
    %v173 = vperm.slane %v84, 0
    %v174 = vperm.slane %v85, 0
    %v175 = vperm.slane %v86, 0
    %v176 = vperm.slane %v87, 0
    %v177 = vperm.slane %v88, 0
    %v178 = vperm.slane %v89, 0
    %v179 = vperm.slane %v90, 0
    %v180 = vperm.slane %v91, 0
    %v181 = vperm.slane %v92, 0
    %v195 = vsel %vm121, %v157, 0
    %197 = vmatpush.msra.mxu0 0.0
    %198 = vmatpush.msra.mxu0 0.0
    %199 = vmatpush.msra.mxu0 0.0
    %200 = vmatpush.msra.mxu0 0.0
    %201 = vmatpush.msra.mxu0 0.0
    %202 = vmatpush.msra.mxu0 0.0
    %203 = vmatpush.msra.mxu0 0.0
    %204 = vmatpush.msra.mxu0 0.0
    %205 = vmatpush.msra.mxu0 0.0
    %206 = vmatpush.msra.mxu0 0.0
    %207 = vmatpush.msra.mxu0 0.0
    %208 = vmatpush.msra.mxu0 0.0
    %209 = vmatpush.msra.mxu0 %v36
    %210 = vmatpush.msra.mxu0 %v35
    %211 = vmatpush.msra.mxu0 %v34
    %212 = vmatpush.msra.mxu0 %v33
    %213 = vmatmul.f32.gmra.mxu0 %v195
    %v214 = vpop.f32.mrf.mxu0
    %v215 = vadd.f32 %v170, %v214
    %216 = vdwg.mxu0
    %217 = vmatpush.msra.mxu0 0.0
    %218 = vmatpush.msra.mxu0 0.0
    %219 = vmatpush.msra.mxu0 0.0
    %220 = vmatpush.msra.mxu0 0.0
    %221 = vmatpush.msra.mxu0 0.0
    %222 = vmatpush.msra.mxu0 0.0
    %223 = vmatpush.msra.mxu0 0.0
    %224 = vmatpush.msra.mxu0 0.0
    %225 = vmatpush.msra.mxu0 0.0
    %226 = vmatpush.msra.mxu0 0.0
    %227 = vmatpush.msra.mxu0 0.0
    %228 = vmatpush.msra.mxu0 0.0
    %229 = vmatpush.msra.mxu0 %v40
    %230 = vmatpush.msra.mxu0 %v39
    %231 = vmatpush.msra.mxu0 %v38
    %232 = vmatpush.msra.mxu0 %v37
    %233 = vmatmul.f32.gmra.mxu0 %v195
    %v234 = vpop.f32.mrf.mxu0
    %v235 = vadd.f32 %v171, %v234
    %236 = vdwg.mxu0
    %237 = vmatpush.msra.mxu0 0.0
    %238 = vmatpush.msra.mxu0 0.0
    %239 = vmatpush.msra.mxu0 0.0
    %240 = vmatpush.msra.mxu0 0.0
    %241 = vmatpush.msra.mxu0 0.0
    %242 = vmatpush.msra.mxu0 0.0
    %243 = vmatpush.msra.mxu0 0.0
    %244 = vmatpush.msra.mxu0 0.0
    %245 = vmatpush.msra.mxu0 0.0
    %246 = vmatpush.msra.mxu0 0.0
    %247 = vmatpush.msra.mxu0 0.0
    %248 = vmatpush.msra.mxu0 0.0
    %249 = vmatpush.msra.mxu0 %v44
    %250 = vmatpush.msra.mxu0 %v43
    %251 = vmatpush.msra.mxu0 %v42
    %252 = vmatpush.msra.mxu0 %v41
    %253 = vmatmul.f32.gmra.mxu0 %v195
    %v254 = vpop.f32.mrf.mxu0
    %v255 = vadd.f32 %v172, %v254
    %256 = vdwg.mxu0
    %257 = vmatpush.msra.mxu0 0.0
    %258 = vmatpush.msra.mxu0 0.0
    %259 = vmatpush.msra.mxu0 0.0
    %260 = vmatpush.msra.mxu0 0.0
    %261 = vmatpush.msra.mxu0 0.0
    %262 = vmatpush.msra.mxu0 0.0
    %263 = vmatpush.msra.mxu0 0.0
    %264 = vmatpush.msra.mxu0 0.0
    %265 = vmatpush.msra.mxu0 0.0
    %266 = vmatpush.msra.mxu0 0.0
    %267 = vmatpush.msra.mxu0 0.0
    %268 = vmatpush.msra.mxu0 0.0
    %269 = vmatpush.msra.mxu0 %v48
    %270 = vmatpush.msra.mxu0 %v47
    %271 = vmatpush.msra.mxu0 %v46
    %272 = vmatpush.msra.mxu0 %v45
    %273 = vmatmul.f32.gmra.mxu0 %v195
    %v274 = vpop.f32.mrf.mxu0
    %v275 = vadd.f32 %v173, %v274
    %276 = vdwg.mxu0
    %277 = vmatpush.msra.mxu0 0.0
    %278 = vmatpush.msra.mxu0 0.0
    %279 = vmatpush.msra.mxu0 0.0
    %280 = vmatpush.msra.mxu0 0.0
    %281 = vmatpush.msra.mxu0 0.0
    %282 = vmatpush.msra.mxu0 0.0
    %283 = vmatpush.msra.mxu0 0.0
    %284 = vmatpush.msra.mxu0 0.0
    %285 = vmatpush.msra.mxu0 0.0
    %286 = vmatpush.msra.mxu0 0.0
    %287 = vmatpush.msra.mxu0 0.0
    %288 = vmatpush.msra.mxu0 0.0
    %289 = vmatpush.msra.mxu0 %v52
    %290 = vmatpush.msra.mxu0 %v51
    %291 = vmatpush.msra.mxu0 %v50
    %292 = vmatpush.msra.mxu0 %v49
    %293 = vmatmul.f32.gmra.mxu0 %v195
    %v294 = vpop.f32.mrf.mxu0
    %v295 = vadd.f32 %v174, %v294
    %296 = vdwg.mxu0
    %297 = vmatpush.msra.mxu0 0.0
    %298 = vmatpush.msra.mxu0 0.0
    %299 = vmatpush.msra.mxu0 0.0
    %300 = vmatpush.msra.mxu0 0.0
    %301 = vmatpush.msra.mxu0 0.0
    %302 = vmatpush.msra.mxu0 0.0
    %303 = vmatpush.msra.mxu0 0.0
    %304 = vmatpush.msra.mxu0 0.0
    %305 = vmatpush.msra.mxu0 0.0
    %306 = vmatpush.msra.mxu0 0.0
    %307 = vmatpush.msra.mxu0 0.0
    %308 = vmatpush.msra.mxu0 0.0
    %309 = vmatpush.msra.mxu0 %v56
    %310 = vmatpush.msra.mxu0 %v55
    %311 = vmatpush.msra.mxu0 %v54
    %312 = vmatpush.msra.mxu0 %v53
    %313 = vmatmul.f32.gmra.mxu0 %v195
    %v314 = vpop.f32.mrf.mxu0
    %v315 = vadd.f32 %v175, %v314
    %316 = vdwg.mxu0
    %317 = vmatpush.msra.mxu0 0.0
    %318 = vmatpush.msra.mxu0 0.0
    %319 = vmatpush.msra.mxu0 0.0
    %320 = vmatpush.msra.mxu0 0.0
    %321 = vmatpush.msra.mxu0 0.0
    %322 = vmatpush.msra.mxu0 0.0
    %323 = vmatpush.msra.mxu0 0.0
    %324 = vmatpush.msra.mxu0 0.0
    %325 = vmatpush.msra.mxu0 0.0
    %326 = vmatpush.msra.mxu0 0.0
    %327 = vmatpush.msra.mxu0 0.0
    %328 = vmatpush.msra.mxu0 0.0
    %329 = vmatpush.msra.mxu0 %v60
    %330 = vmatpush.msra.mxu0 %v59
    %331 = vmatpush.msra.mxu0 %v58
    %332 = vmatpush.msra.mxu0 %v57
    %333 = vmatmul.f32.gmra.mxu0 %v195
    %v334 = vpop.f32.mrf.mxu0
    %v335 = vadd.f32 %v176, %v334
    %336 = vdwg.mxu0
    %337 = vmatpush.msra.mxu0 0.0
    %338 = vmatpush.msra.mxu0 0.0
    %339 = vmatpush.msra.mxu0 0.0
    %340 = vmatpush.msra.mxu0 0.0
    %341 = vmatpush.msra.mxu0 0.0
    %342 = vmatpush.msra.mxu0 0.0
    %343 = vmatpush.msra.mxu0 0.0
    %344 = vmatpush.msra.mxu0 0.0
    %345 = vmatpush.msra.mxu0 0.0
    %346 = vmatpush.msra.mxu0 0.0
    %347 = vmatpush.msra.mxu0 0.0
    %348 = vmatpush.msra.mxu0 0.0
    %349 = vmatpush.msra.mxu0 %v64
    %350 = vmatpush.msra.mxu0 %v63
    %351 = vmatpush.msra.mxu0 %v62
    %352 = vmatpush.msra.mxu0 %v61
    %353 = vmatmul.f32.gmra.mxu0 %v195
    %v354 = vpop.f32.mrf.mxu0
    %v355 = vadd.f32 %v177, %v354
    %356 = vdwg.mxu0
    %357 = vmatpush.msra.mxu0 0.0
    %358 = vmatpush.msra.mxu0 0.0
    %359 = vmatpush.msra.mxu0 0.0
    %360 = vmatpush.msra.mxu0 0.0
    %361 = vmatpush.msra.mxu0 0.0
    %362 = vmatpush.msra.mxu0 0.0
    %363 = vmatpush.msra.mxu0 0.0
    %364 = vmatpush.msra.mxu0 0.0
    %365 = vmatpush.msra.mxu0 0.0
    %366 = vmatpush.msra.mxu0 0.0
    %367 = vmatpush.msra.mxu0 0.0
    %368 = vmatpush.msra.mxu0 0.0
    %369 = vmatpush.msra.mxu0 %v68
    %370 = vmatpush.msra.mxu0 %v67
    %371 = vmatpush.msra.mxu0 %v66
    %372 = vmatpush.msra.mxu0 %v65
    %373 = vmatmul.f32.gmra.mxu0 %v195
    %v374 = vpop.f32.mrf.mxu0
    %v375 = vadd.f32 %v178, %v374
    %376 = vdwg.mxu0
    %377 = vmatpush.msra.mxu0 0.0
    %378 = vmatpush.msra.mxu0 0.0
    %379 = vmatpush.msra.mxu0 0.0
    %380 = vmatpush.msra.mxu0 0.0
    %381 = vmatpush.msra.mxu0 0.0
    %382 = vmatpush.msra.mxu0 0.0
    %383 = vmatpush.msra.mxu0 0.0
    %384 = vmatpush.msra.mxu0 0.0
    %385 = vmatpush.msra.mxu0 0.0
    %386 = vmatpush.msra.mxu0 0.0
    %387 = vmatpush.msra.mxu0 0.0
    %388 = vmatpush.msra.mxu0 0.0
    %389 = vmatpush.msra.mxu0 %v72
    %390 = vmatpush.msra.mxu0 %v71
    %391 = vmatpush.msra.mxu0 %v70
    %392 = vmatpush.msra.mxu0 %v69
    %393 = vmatmul.f32.gmra.mxu0 %v195
    %v394 = vpop.f32.mrf.mxu0
    %v395 = vadd.f32 %v179, %v394
    %396 = vdwg.mxu0
    %397 = vmatpush.msra.mxu0 0.0
    %398 = vmatpush.msra.mxu0 0.0
    %399 = vmatpush.msra.mxu0 0.0
    %400 = vmatpush.msra.mxu0 0.0
    %401 = vmatpush.msra.mxu0 0.0
    %402 = vmatpush.msra.mxu0 0.0
    %403 = vmatpush.msra.mxu0 0.0
    %404 = vmatpush.msra.mxu0 0.0
    %405 = vmatpush.msra.mxu0 0.0
    %406 = vmatpush.msra.mxu0 0.0
    %407 = vmatpush.msra.mxu0 0.0
    %408 = vmatpush.msra.mxu0 0.0
    %409 = vmatpush.msra.mxu0 %v76
    %410 = vmatpush.msra.mxu0 %v75
    %411 = vmatpush.msra.mxu0 %v74
    %412 = vmatpush.msra.mxu0 %v73
    %413 = vmatmul.f32.gmra.mxu0 %v195
    %v414 = vpop.f32.mrf.mxu0
    %v415 = vadd.f32 %v180, %v414
    %416 = vdwg.mxu0
    %417 = vmatpush.msra.mxu0 0.0
    %418 = vmatpush.msra.mxu0 0.0
    %419 = vmatpush.msra.mxu0 0.0
    %420 = vmatpush.msra.mxu0 0.0
    %421 = vmatpush.msra.mxu0 0.0
    %422 = vmatpush.msra.mxu0 0.0
    %423 = vmatpush.msra.mxu0 0.0
    %424 = vmatpush.msra.mxu0 0.0
    %425 = vmatpush.msra.mxu0 0.0
    %426 = vmatpush.msra.mxu0 0.0
    %427 = vmatpush.msra.mxu0 0.0
    %428 = vmatpush.msra.mxu0 0.0
    %429 = vmatpush.msra.mxu0 %v80
    %430 = vmatpush.msra.mxu0 %v79
    %431 = vmatpush.msra.mxu0 %v78
    %432 = vmatpush.msra.mxu0 %v77
    %433 = vmatmul.f32.gmra.mxu0 %v195
    %v434 = vpop.f32.mrf.mxu0
    %v435 = vadd.f32 %v181, %v434
    %436 = vdwg.mxu0
    %vm437 = vcmask 64512
    %v439 = vsel %vm437, %v215, 0
    %v442 = vsel %vm437, %v295, 0
    %444 = vmatpush.xpose.msra.mxu0 0.0
    %445 = vmatpush.xpose.msra.mxu0 0.0
    %446 = vmatpush.xpose.msra.mxu0 0.0
    %447 = vmatpush.xpose.msra.mxu0 0.0
    %448 = vmatpush.xpose.msra.mxu0 0.0
    %449 = vmatpush.xpose.msra.mxu0 0.0
    %450 = vmatpush.xpose.msra.mxu0 0.0
    %451 = vmatpush.xpose.msra.mxu0 0.0
    %452 = vmatpush.xpose.msra.mxu0 0.0
    %453 = vmatpush.xpose.msra.mxu0 0.0
    %454 = vmatpush.xpose.msra.mxu0 0.0
    %455 = vmatpush.xpose.msra.mxu0 0.0
    %456 = vmatpush.xpose.msra.mxu0 0.0
    %457 = vmatpush.xpose.msra.mxu0 0.0
    %458 = vmatpush.xpose.msra.mxu0 0.0
    %459 = vmatpush.xpose.msra.mxu0 %v442
    %460 = vmatmul.f32.gmra.mxu0 %v439
    %v461 = vpop.f32.mrf.mxu0
    %v462 = vadd.f32 0.0, %v461
    %463 = vdwg.mxu0
    %v465 = vsel %vm437, %v235, 0
    %v468 = vsel %vm437, %v315, 0
    %470 = vmatpush.xpose.msra.mxu0 0.0
    %471 = vmatpush.xpose.msra.mxu0 0.0
    %472 = vmatpush.xpose.msra.mxu0 0.0
    %473 = vmatpush.xpose.msra.mxu0 0.0
    %474 = vmatpush.xpose.msra.mxu0 0.0
    %475 = vmatpush.xpose.msra.mxu0 0.0
    %476 = vmatpush.xpose.msra.mxu0 0.0
    %477 = vmatpush.xpose.msra.mxu0 0.0
    %478 = vmatpush.xpose.msra.mxu0 0.0
    %479 = vmatpush.xpose.msra.mxu0 0.0
    %480 = vmatpush.xpose.msra.mxu0 0.0
    %481 = vmatpush.xpose.msra.mxu0 0.0
    %482 = vmatpush.xpose.msra.mxu0 0.0
    %483 = vmatpush.xpose.msra.mxu0 0.0
    %484 = vmatpush.xpose.msra.mxu0 0.0
    %485 = vmatpush.xpose.msra.mxu0 %v468
    %486 = vmatmul.f32.gmra.mxu0 %v465
    %v487 = vpop.f32.mrf.mxu0
    %v488 = vadd.f32 0.0, %v487
    %489 = vdwg.mxu0
    %v491 = vsel %vm437, %v255, 0
    %v494 = vsel %vm437, %v335, 0
    %496 = vmatpush.xpose.msra.mxu0 0.0
    %497 = vmatpush.xpose.msra.mxu0 0.0
    %498 = vmatpush.xpose.msra.mxu0 0.0
    %499 = vmatpush.xpose.msra.mxu0 0.0
    %500 = vmatpush.xpose.msra.mxu0 0.0
    %501 = vmatpush.xpose.msra.mxu0 0.0
    %502 = vmatpush.xpose.msra.mxu0 0.0
    %503 = vmatpush.xpose.msra.mxu0 0.0
    %504 = vmatpush.xpose.msra.mxu0 0.0
    %505 = vmatpush.xpose.msra.mxu0 0.0
    %506 = vmatpush.xpose.msra.mxu0 0.0
    %507 = vmatpush.xpose.msra.mxu0 0.0
    %508 = vmatpush.xpose.msra.mxu0 0.0
    %509 = vmatpush.xpose.msra.mxu0 0.0
    %510 = vmatpush.xpose.msra.mxu0 0.0
    %511 = vmatpush.xpose.msra.mxu0 %v494
    %512 = vmatmul.f32.gmra.mxu0 %v491
    %v513 = vpop.f32.mrf.mxu0
    %v514 = vadd.f32 0.0, %v513
    %515 = vdwg.mxu0
    %v517 = vsel %vm437, %v275, 0
    %v520 = vsel %vm437, %v355, 0
    %522 = vmatpush.xpose.msra.mxu0 0.0
    %523 = vmatpush.xpose.msra.mxu0 0.0
    %524 = vmatpush.xpose.msra.mxu0 0.0
    %525 = vmatpush.xpose.msra.mxu0 0.0
    %526 = vmatpush.xpose.msra.mxu0 0.0
    %527 = vmatpush.xpose.msra.mxu0 0.0
    %528 = vmatpush.xpose.msra.mxu0 0.0
    %529 = vmatpush.xpose.msra.mxu0 0.0
    %530 = vmatpush.xpose.msra.mxu0 0.0
    %531 = vmatpush.xpose.msra.mxu0 0.0
    %532 = vmatpush.xpose.msra.mxu0 0.0
    %533 = vmatpush.xpose.msra.mxu0 0.0
    %534 = vmatpush.xpose.msra.mxu0 0.0
    %535 = vmatpush.xpose.msra.mxu0 0.0
    %536 = vmatpush.xpose.msra.mxu0 0.0
    %537 = vmatpush.xpose.msra.mxu0 %v520
    %538 = vmatmul.f32.gmra.mxu0 %v517
    %v539 = vpop.f32.mrf.mxu0
    %v540 = vadd.f32 0.0, %v539
    %541 = vdwg.mxu0
    %v542 = vmul.f32 %v462, 0.35355338
    %v543 = vmul.f32 %v488, 0.35355338
    %v544 = vmul.f32 %v514, 0.35355338
    %v545 = vmul.f32 %v540, 0.35355338
    %v546 = vsel %vm437, %v542, -inf
    %547 = vmax.xlane.f32.xlu0 %v546
    %v548 = vpop.xlane.xlu0 %547
    %v549 = vsel %vm437, %v543, -inf
    %550 = vmax.xlane.f32.xlu0 %v549
    %v551 = vpop.xlane.xlu0 %550
    %v552 = vsel %vm437, %v544, -inf
    %553 = vmax.xlane.f32.xlu0 %v552
    %v554 = vpop.xlane.xlu0 %553
    %v555 = vsel %vm437, %v545, -inf
    %556 = vmax.xlane.f32.xlu0 %v555
    %v557 = vpop.xlane.xlu0 %556
    %v558 = vsub.f32 %v542, %v548
    %v559 = vsub.f32 %v543, %v551
    %v560 = vsub.f32 %v544, %v554
    %v561 = vsub.f32 %v545, %v557
    %v562 = vmul.f32 %v558, 1.442695
    %v563 = vpow.pop %v562
    %v564 = vmul.f32 %v559, 1.442695
    %v565 = vpow.pop %v564
    %v566 = vmul.f32 %v560, 1.442695
    %v567 = vpow.pop %v566
    %v568 = vmul.f32 %v561, 1.442695
    %v569 = vpow.pop %v568
    %v570 = vsel %vm437, %v563, 0.0
    %571 = vadd.xlane.f32.xlu0 %v570
    %v572 = vpop.xlane.xlu0 %571
    %v573 = vsel %vm437, %v565, 0.0
    %574 = vadd.xlane.f32.xlu0 %v573
    %v575 = vpop.xlane.xlu0 %574
    %v576 = vsel %vm437, %v567, 0.0
    %577 = vadd.xlane.f32.xlu0 %v576
    %v578 = vpop.xlane.xlu0 %577
    %v579 = vsel %vm437, %v569, 0.0
    %580 = vadd.xlane.f32.xlu0 %v579
    %v581 = vpop.xlane.xlu0 %580
    %v582 = vrcp.pop %v572
    %v583 = vrcp.pop %v575
    %v584 = vrcp.pop %v578
    %v585 = vrcp.pop %v581
    %v586 = vmul.f32 %v563, %v582
    %v587 = vmul.f32 %v565, %v583
    %v588 = vmul.f32 %v567, %v584
    %v589 = vmul.f32 %v569, %v585
    %v591 = vsel %vm437, %v586, 0
    %593 = vmatpush.msra.mxu0 0.0
    %594 = vmatpush.msra.mxu0 0.0
    %595 = vmatpush.msra.mxu0 0.0
    %596 = vmatpush.msra.mxu0 0.0
    %597 = vmatpush.msra.mxu0 0.0
    %598 = vmatpush.msra.mxu0 0.0
    %599 = vmatpush.msra.mxu0 0.0
    %600 = vmatpush.msra.mxu0 0.0
    %601 = vmatpush.msra.mxu0 0.0
    %602 = vmatpush.msra.mxu0 0.0
    %603 = vmatpush.msra.mxu0 0.0
    %604 = vmatpush.msra.mxu0 0.0
    %605 = vmatpush.msra.mxu0 0.0
    %606 = vmatpush.msra.mxu0 0.0
    %607 = vmatpush.msra.mxu0 0.0
    %608 = vmatpush.msra.mxu0 %v375
    %609 = vmatmul.f32.gmra.mxu0 %v591
    %v610 = vpop.f32.mrf.mxu0
    %v611 = vadd.f32 0.0, %v610
    %612 = vdwg.mxu0
    %v614 = vsel %vm437, %v587, 0
    %616 = vmatpush.msra.mxu0 0.0
    %617 = vmatpush.msra.mxu0 0.0
    %618 = vmatpush.msra.mxu0 0.0
    %619 = vmatpush.msra.mxu0 0.0
    %620 = vmatpush.msra.mxu0 0.0
    %621 = vmatpush.msra.mxu0 0.0
    %622 = vmatpush.msra.mxu0 0.0
    %623 = vmatpush.msra.mxu0 0.0
    %624 = vmatpush.msra.mxu0 0.0
    %625 = vmatpush.msra.mxu0 0.0
    %626 = vmatpush.msra.mxu0 0.0
    %627 = vmatpush.msra.mxu0 0.0
    %628 = vmatpush.msra.mxu0 0.0
    %629 = vmatpush.msra.mxu0 0.0
    %630 = vmatpush.msra.mxu0 0.0
    %631 = vmatpush.msra.mxu0 %v395
    %632 = vmatmul.f32.gmra.mxu0 %v614
    %v633 = vpop.f32.mrf.mxu0
    %v634 = vadd.f32 0.0, %v633
    %635 = vdwg.mxu0
    %v637 = vsel %vm437, %v588, 0
    %639 = vmatpush.msra.mxu0 0.0
    %640 = vmatpush.msra.mxu0 0.0
    %641 = vmatpush.msra.mxu0 0.0
    %642 = vmatpush.msra.mxu0 0.0
    %643 = vmatpush.msra.mxu0 0.0
    %644 = vmatpush.msra.mxu0 0.0
    %645 = vmatpush.msra.mxu0 0.0
    %646 = vmatpush.msra.mxu0 0.0
    %647 = vmatpush.msra.mxu0 0.0
    %648 = vmatpush.msra.mxu0 0.0
    %649 = vmatpush.msra.mxu0 0.0
    %650 = vmatpush.msra.mxu0 0.0
    %651 = vmatpush.msra.mxu0 0.0
    %652 = vmatpush.msra.mxu0 0.0
    %653 = vmatpush.msra.mxu0 0.0
    %654 = vmatpush.msra.mxu0 %v415
    %655 = vmatmul.f32.gmra.mxu0 %v637
    %v656 = vpop.f32.mrf.mxu0
    %v657 = vadd.f32 0.0, %v656
    %658 = vdwg.mxu0
    %v660 = vsel %vm437, %v589, 0
    %662 = vmatpush.msra.mxu0 0.0
    %663 = vmatpush.msra.mxu0 0.0
    %664 = vmatpush.msra.mxu0 0.0
    %665 = vmatpush.msra.mxu0 0.0
    %666 = vmatpush.msra.mxu0 0.0
    %667 = vmatpush.msra.mxu0 0.0
    %668 = vmatpush.msra.mxu0 0.0
    %669 = vmatpush.msra.mxu0 0.0
    %670 = vmatpush.msra.mxu0 0.0
    %671 = vmatpush.msra.mxu0 0.0
    %672 = vmatpush.msra.mxu0 0.0
    %673 = vmatpush.msra.mxu0 0.0
    %674 = vmatpush.msra.mxu0 0.0
    %675 = vmatpush.msra.mxu0 0.0
    %676 = vmatpush.msra.mxu0 0.0
    %677 = vmatpush.msra.mxu0 %v435
    %678 = vmatmul.f32.gmra.mxu0 %v660
    %v679 = vpop.f32.mrf.mxu0
    %v680 = vadd.f32 0.0, %v679
    %681 = vdwg.mxu0
    %v683 = vsel %vm437, %v611, 0
    %685 = vmatpush.msra.mxu0 0.0
    %686 = vmatpush.msra.mxu0 0.0
    %687 = vmatpush.msra.mxu0 0.0
    %688 = vmatpush.msra.mxu0 0.0
    %689 = vmatpush.msra.mxu0 0.0
    %690 = vmatpush.msra.mxu0 0.0
    %691 = vmatpush.msra.mxu0 0.0
    %692 = vmatpush.msra.mxu0 0.0
    %693 = vmatpush.msra.mxu0 0.0
    %694 = vmatpush.msra.mxu0 0.0
    %695 = vmatpush.msra.mxu0 0.0
    %696 = vmatpush.msra.mxu0 0.0
    %697 = vmatpush.msra.mxu0 0.0
    %698 = vmatpush.msra.mxu0 0.0
    %699 = vmatpush.msra.mxu0 0.0
    %700 = vmatpush.msra.mxu0 %v93
    %701 = vmatmul.f32.gmra.mxu0 %v683
    %v702 = vpop.f32.mrf.mxu0
    %v703 = vadd.f32 0.0, %v702
    %704 = vdwg.mxu0
    %v706 = vsel %vm437, %v634, 0
    %708 = vmatpush.msra.mxu0 0.0
    %709 = vmatpush.msra.mxu0 0.0
    %710 = vmatpush.msra.mxu0 0.0
    %711 = vmatpush.msra.mxu0 0.0
    %712 = vmatpush.msra.mxu0 0.0
    %713 = vmatpush.msra.mxu0 0.0
    %714 = vmatpush.msra.mxu0 0.0
    %715 = vmatpush.msra.mxu0 0.0
    %716 = vmatpush.msra.mxu0 0.0
    %717 = vmatpush.msra.mxu0 0.0
    %718 = vmatpush.msra.mxu0 0.0
    %719 = vmatpush.msra.mxu0 0.0
    %720 = vmatpush.msra.mxu0 0.0
    %721 = vmatpush.msra.mxu0 0.0
    %722 = vmatpush.msra.mxu0 0.0
    %723 = vmatpush.msra.mxu0 %v94
    %724 = vmatmul.f32.gmra.mxu0 %v706
    %v725 = vpop.f32.mrf.mxu0
    %v726 = vadd.f32 0.0, %v725
    %727 = vdwg.mxu0
    %v729 = vsel %vm437, %v657, 0
    %731 = vmatpush.msra.mxu0 0.0
    %732 = vmatpush.msra.mxu0 0.0
    %733 = vmatpush.msra.mxu0 0.0
    %734 = vmatpush.msra.mxu0 0.0
    %735 = vmatpush.msra.mxu0 0.0
    %736 = vmatpush.msra.mxu0 0.0
    %737 = vmatpush.msra.mxu0 0.0
    %738 = vmatpush.msra.mxu0 0.0
    %739 = vmatpush.msra.mxu0 0.0
    %740 = vmatpush.msra.mxu0 0.0
    %741 = vmatpush.msra.mxu0 0.0
    %742 = vmatpush.msra.mxu0 0.0
    %743 = vmatpush.msra.mxu0 0.0
    %744 = vmatpush.msra.mxu0 0.0
    %745 = vmatpush.msra.mxu0 0.0
    %746 = vmatpush.msra.mxu0 %v95
    %747 = vmatmul.f32.gmra.mxu0 %v729
    %v748 = vpop.f32.mrf.mxu0
    %v749 = vadd.f32 0.0, %v748
    %750 = vdwg.mxu0
    %v752 = vsel %vm437, %v680, 0
    %754 = vmatpush.msra.mxu0 0.0
    %755 = vmatpush.msra.mxu0 0.0
    %756 = vmatpush.msra.mxu0 0.0
    %757 = vmatpush.msra.mxu0 0.0
    %758 = vmatpush.msra.mxu0 0.0
    %759 = vmatpush.msra.mxu0 0.0
    %760 = vmatpush.msra.mxu0 0.0
    %761 = vmatpush.msra.mxu0 0.0
    %762 = vmatpush.msra.mxu0 0.0
    %763 = vmatpush.msra.mxu0 0.0
    %764 = vmatpush.msra.mxu0 0.0
    %765 = vmatpush.msra.mxu0 0.0
    %766 = vmatpush.msra.mxu0 0.0
    %767 = vmatpush.msra.mxu0 0.0
    %768 = vmatpush.msra.mxu0 0.0
    %769 = vmatpush.msra.mxu0 %v96
    %770 = vmatmul.f32.gmra.mxu0 %v752
    %v771 = vpop.f32.mrf.mxu0
    %v772 = vadd.f32 0.0, %v771
    %773 = vdwg.mxu0
    %v774 = vsel %vm121, %v703, 0.0
    %v775 = vsel %vm121, %v726, 0.0
    %v776 = vadd.f32 %v774, %v775
    %v777 = vsel %vm121, %v749, 0.0
    %v778 = vadd.f32 %v776, %v777
    %v779 = vsel %vm121, %v772, 0.0
    %v780 = vadd.f32 %v778, %v779
    %v782 = vperm.slane %v97, 0
    %v784 = vadd.f32 %v780, %v782
    %v785 = vadd.f32 %v120, %v784
    %v786 = vsel %vm121, %v785, 0.0
    %v787 = vrot.slane %v786, 4
    %v788 = vadd.f32 %v786, %v787
    %v789 = vrot.slane %v788, 2
    %v790 = vadd.f32 %v788, %v789
    %v791 = vrot.slane %v790, 1
    %v792 = vadd.f32 %v790, %v791
    %v793 = vmul.f32 %v792, %v135
    %v794 = vsub.f32 %v785, %v793
    %v795 = vmul.f32 %v794, %v794
    %v796 = vsel %vm121, %v795, 0.0
    %v797 = vrot.slane %v796, 4
    %v798 = vadd.f32 %v796, %v797
    %v799 = vrot.slane %v798, 2
    %v800 = vadd.f32 %v798, %v799
    %v801 = vrot.slane %v800, 1
    %v802 = vadd.f32 %v800, %v801
    %v803 = vmul.f32 %v802, 0.14285715
    %v804 = vrsqrt.pop %v803
    %v805 = vmul.f32 %v804, %v803
    %v806 = vmul.f32 %v805, %v804
    %v807 = vmul.f32 0.5, %v806
    %v808 = vsub.f32 1.5, %v807
    %v809 = vmul.f32 %v804, %v808
    %vm810 = vweird.f32 %v803
    %vm811 = vweird.f32 %v804
    %vm812 = vmor %vm810, %vm811
    %v813 = vsel %vm812, %v804, %v809
    %v814 = vmul.f32 %v794, %v813
    %v816 = vperm.slane %v102, 0
    %v819 = vsel %vm121, %v814, 0
    %821 = vmatpush.msra.mxu0 0.0
    %822 = vmatpush.msra.mxu0 0.0
    %823 = vmatpush.msra.mxu0 0.0
    %824 = vmatpush.msra.mxu0 0.0
    %825 = vmatpush.msra.mxu0 0.0
    %826 = vmatpush.msra.mxu0 0.0
    %827 = vmatpush.msra.mxu0 0.0
    %828 = vmatpush.msra.mxu0 0.0
    %829 = vmatpush.msra.mxu0 0.0
    %830 = vmatpush.msra.mxu0 0.0
    %831 = vmatpush.msra.mxu0 0.0
    %832 = vmatpush.msra.mxu0 0.0
    %833 = vmatpush.msra.mxu0 %v101
    %834 = vmatpush.msra.mxu0 %v100
    %835 = vmatpush.msra.mxu0 %v99
    %836 = vmatpush.msra.mxu0 %v98
    %837 = vmatmul.f32.gmra.mxu0 %v819
    %v838 = vpop.f32.mrf.mxu0
    %v839 = vadd.f32 %v816, %v838
    %840 = vdwg.mxu0
    %v841 = vmax.f32 %v839, 0.0
    %v843 = vperm.slane %v119, 0
    %845 = vmatpush.msra.mxu0 %v118
    %846 = vmatpush.msra.mxu0 %v117
    %847 = vmatpush.msra.mxu0 %v116
    %848 = vmatpush.msra.mxu0 %v115
    %849 = vmatpush.msra.mxu0 %v114
    %850 = vmatpush.msra.mxu0 %v113
    %851 = vmatpush.msra.mxu0 %v112
    %852 = vmatpush.msra.mxu0 %v111
    %853 = vmatpush.msra.mxu0 %v110
    %854 = vmatpush.msra.mxu0 %v109
    %855 = vmatpush.msra.mxu0 %v108
    %856 = vmatpush.msra.mxu0 %v107
    %857 = vmatpush.msra.mxu0 %v106
    %858 = vmatpush.msra.mxu0 %v105
    %859 = vmatpush.msra.mxu0 %v104
    %860 = vmatpush.msra.mxu0 %v103
    %861 = vmatmul.f32.gmra.mxu0 %v841
    %v862 = vpop.f32.mrf.mxu0
    %v863 = vadd.f32 %v843, %v862
    %864 = vdwg.mxu0
    %v865 = vadd.f32 %v785, %v863
    %866 = vst.msk [vmem:[#allocation2] sm:$0xff] %vm121, %v865
    %s867 = scalar_lea.vmem %s0, 8
    %v868 = vld [vmem:[%s867] sm:$0xff]
    %v869 = vsel %vm121, %v868, 0.0
    %v870 = vrot.slane %v869, 4
    %v871 = vadd.f32 %v869, %v870
    %v872 = vrot.slane %v871, 2
    %v873 = vadd.f32 %v871, %v872
    %v874 = vrot.slane %v873, 1
    %v875 = vadd.f32 %v873, %v874
    %v876 = vmul.f32 %v875, %v135
    %v877 = vsub.f32 %v868, %v876
    %v878 = vmul.f32 %v877, %v877
    %v879 = vsel %vm121, %v878, 0.0
    %v880 = vrot.slane %v879, 4
    %v881 = vadd.f32 %v879, %v880
    %v882 = vrot.slane %v881, 2
    %v883 = vadd.f32 %v881, %v882
    %v884 = vrot.slane %v883, 1
    %v885 = vadd.f32 %v883, %v884
    %v886 = vmul.f32 %v885, 0.14285715
    %v887 = vrsqrt.pop %v886
    %v888 = vmul.f32 %v887, %v886
    %v889 = vmul.f32 %v888, %v887
    %v890 = vmul.f32 0.5, %v889
    %v891 = vsub.f32 1.5, %v890
    %v892 = vmul.f32 %v887, %v891
    %vm893 = vweird.f32 %v886
    %vm894 = vweird.f32 %v887
    %vm895 = vmor %vm893, %vm894
    %v896 = vsel %vm895, %v887, %v892
    %v897 = vmul.f32 %v877, %v896
    %v899 = vsel %vm121, %v897, 0
    %901 = vmatpush.msra.mxu0 0.0
    %902 = vmatpush.msra.mxu0 0.0
    %903 = vmatpush.msra.mxu0 0.0
    %904 = vmatpush.msra.mxu0 0.0
    %905 = vmatpush.msra.mxu0 0.0
    %906 = vmatpush.msra.mxu0 0.0
    %907 = vmatpush.msra.mxu0 0.0
    %908 = vmatpush.msra.mxu0 0.0
    %909 = vmatpush.msra.mxu0 0.0
    %910 = vmatpush.msra.mxu0 0.0
    %911 = vmatpush.msra.mxu0 0.0
    %912 = vmatpush.msra.mxu0 0.0
    %913 = vmatpush.msra.mxu0 %v36
    %914 = vmatpush.msra.mxu0 %v35
    %915 = vmatpush.msra.mxu0 %v34
    %916 = vmatpush.msra.mxu0 %v33
    %917 = vmatmul.f32.gmra.mxu0 %v899
    %v918 = vpop.f32.mrf.mxu0
    %v919 = vadd.f32 %v170, %v918
    %920 = vdwg.mxu0
    %921 = vmatpush.msra.mxu0 0.0
    %922 = vmatpush.msra.mxu0 0.0
    %923 = vmatpush.msra.mxu0 0.0
    %924 = vmatpush.msra.mxu0 0.0
    %925 = vmatpush.msra.mxu0 0.0
    %926 = vmatpush.msra.mxu0 0.0
    %927 = vmatpush.msra.mxu0 0.0
    %928 = vmatpush.msra.mxu0 0.0
    %929 = vmatpush.msra.mxu0 0.0
    %930 = vmatpush.msra.mxu0 0.0
    %931 = vmatpush.msra.mxu0 0.0
    %932 = vmatpush.msra.mxu0 0.0
    %933 = vmatpush.msra.mxu0 %v40
    %934 = vmatpush.msra.mxu0 %v39
    %935 = vmatpush.msra.mxu0 %v38
    %936 = vmatpush.msra.mxu0 %v37
    %937 = vmatmul.f32.gmra.mxu0 %v899
    %v938 = vpop.f32.mrf.mxu0
    %v939 = vadd.f32 %v171, %v938
    %940 = vdwg.mxu0
    %941 = vmatpush.msra.mxu0 0.0
    %942 = vmatpush.msra.mxu0 0.0
    %943 = vmatpush.msra.mxu0 0.0
    %944 = vmatpush.msra.mxu0 0.0
    %945 = vmatpush.msra.mxu0 0.0
    %946 = vmatpush.msra.mxu0 0.0
    %947 = vmatpush.msra.mxu0 0.0
    %948 = vmatpush.msra.mxu0 0.0
    %949 = vmatpush.msra.mxu0 0.0
    %950 = vmatpush.msra.mxu0 0.0
    %951 = vmatpush.msra.mxu0 0.0
    %952 = vmatpush.msra.mxu0 0.0
    %953 = vmatpush.msra.mxu0 %v44
    %954 = vmatpush.msra.mxu0 %v43
    %955 = vmatpush.msra.mxu0 %v42
    %956 = vmatpush.msra.mxu0 %v41
    %957 = vmatmul.f32.gmra.mxu0 %v899
    %v958 = vpop.f32.mrf.mxu0
    %v959 = vadd.f32 %v172, %v958
    %960 = vdwg.mxu0
    %961 = vmatpush.msra.mxu0 0.0
    %962 = vmatpush.msra.mxu0 0.0
    %963 = vmatpush.msra.mxu0 0.0
    %964 = vmatpush.msra.mxu0 0.0
    %965 = vmatpush.msra.mxu0 0.0
    %966 = vmatpush.msra.mxu0 0.0
    %967 = vmatpush.msra.mxu0 0.0
    %968 = vmatpush.msra.mxu0 0.0
    %969 = vmatpush.msra.mxu0 0.0
    %970 = vmatpush.msra.mxu0 0.0
    %971 = vmatpush.msra.mxu0 0.0
    %972 = vmatpush.msra.mxu0 0.0
    %973 = vmatpush.msra.mxu0 %v48
    %974 = vmatpush.msra.mxu0 %v47
    %975 = vmatpush.msra.mxu0 %v46
    %976 = vmatpush.msra.mxu0 %v45
    %977 = vmatmul.f32.gmra.mxu0 %v899
    %v978 = vpop.f32.mrf.mxu0
    %v979 = vadd.f32 %v173, %v978
    %980 = vdwg.mxu0
    %981 = vmatpush.msra.mxu0 0.0
    %982 = vmatpush.msra.mxu0 0.0
    %983 = vmatpush.msra.mxu0 0.0
    %984 = vmatpush.msra.mxu0 0.0
    %985 = vmatpush.msra.mxu0 0.0
    %986 = vmatpush.msra.mxu0 0.0
    %987 = vmatpush.msra.mxu0 0.0
    %988 = vmatpush.msra.mxu0 0.0
    %989 = vmatpush.msra.mxu0 0.0
    %990 = vmatpush.msra.mxu0 0.0
    %991 = vmatpush.msra.mxu0 0.0
    %992 = vmatpush.msra.mxu0 0.0
    %993 = vmatpush.msra.mxu0 %v52
    %994 = vmatpush.msra.mxu0 %v51
    %995 = vmatpush.msra.mxu0 %v50
    %996 = vmatpush.msra.mxu0 %v49
    %997 = vmatmul.f32.gmra.mxu0 %v899
    %v998 = vpop.f32.mrf.mxu0
    %v999 = vadd.f32 %v174, %v998
    %1000 = vdwg.mxu0
    %1001 = vmatpush.msra.mxu0 0.0
    %1002 = vmatpush.msra.mxu0 0.0
    %1003 = vmatpush.msra.mxu0 0.0
    %1004 = vmatpush.msra.mxu0 0.0
    %1005 = vmatpush.msra.mxu0 0.0
    %1006 = vmatpush.msra.mxu0 0.0
    %1007 = vmatpush.msra.mxu0 0.0
    %1008 = vmatpush.msra.mxu0 0.0
    %1009 = vmatpush.msra.mxu0 0.0
    %1010 = vmatpush.msra.mxu0 0.0
    %1011 = vmatpush.msra.mxu0 0.0
    %1012 = vmatpush.msra.mxu0 0.0
    %1013 = vmatpush.msra.mxu0 %v56
    %1014 = vmatpush.msra.mxu0 %v55
    %1015 = vmatpush.msra.mxu0 %v54
    %1016 = vmatpush.msra.mxu0 %v53
    %1017 = vmatmul.f32.gmra.mxu0 %v899
    %v1018 = vpop.f32.mrf.mxu0
    %v1019 = vadd.f32 %v175, %v1018
    %1020 = vdwg.mxu0
    %1021 = vmatpush.msra.mxu0 0.0
    %1022 = vmatpush.msra.mxu0 0.0
    %1023 = vmatpush.msra.mxu0 0.0
    %1024 = vmatpush.msra.mxu0 0.0
    %1025 = vmatpush.msra.mxu0 0.0
    %1026 = vmatpush.msra.mxu0 0.0
    %1027 = vmatpush.msra.mxu0 0.0
    %1028 = vmatpush.msra.mxu0 0.0
    %1029 = vmatpush.msra.mxu0 0.0
    %1030 = vmatpush.msra.mxu0 0.0
    %1031 = vmatpush.msra.mxu0 0.0
    %1032 = vmatpush.msra.mxu0 0.0
    %1033 = vmatpush.msra.mxu0 %v60
    %1034 = vmatpush.msra.mxu0 %v59
    %1035 = vmatpush.msra.mxu0 %v58
    %1036 = vmatpush.msra.mxu0 %v57
    %1037 = vmatmul.f32.gmra.mxu0 %v899
    %v1038 = vpop.f32.mrf.mxu0
    %v1039 = vadd.f32 %v176, %v1038
    %1040 = vdwg.mxu0
    %1041 = vmatpush.msra.mxu0 0.0
    %1042 = vmatpush.msra.mxu0 0.0
    %1043 = vmatpush.msra.mxu0 0.0
    %1044 = vmatpush.msra.mxu0 0.0
    %1045 = vmatpush.msra.mxu0 0.0
    %1046 = vmatpush.msra.mxu0 0.0
    %1047 = vmatpush.msra.mxu0 0.0
    %1048 = vmatpush.msra.mxu0 0.0
    %1049 = vmatpush.msra.mxu0 0.0
    %1050 = vmatpush.msra.mxu0 0.0
    %1051 = vmatpush.msra.mxu0 0.0
    %1052 = vmatpush.msra.mxu0 0.0
    %1053 = vmatpush.msra.mxu0 %v64
    %1054 = vmatpush.msra.mxu0 %v63
    %1055 = vmatpush.msra.mxu0 %v62
    %1056 = vmatpush.msra.mxu0 %v61
    %1057 = vmatmul.f32.gmra.mxu0 %v899
    %v1058 = vpop.f32.mrf.mxu0
    %v1059 = vadd.f32 %v177, %v1058
    %1060 = vdwg.mxu0
    %1061 = vmatpush.msra.mxu0 0.0
    %1062 = vmatpush.msra.mxu0 0.0
    %1063 = vmatpush.msra.mxu0 0.0
    %1064 = vmatpush.msra.mxu0 0.0
    %1065 = vmatpush.msra.mxu0 0.0
    %1066 = vmatpush.msra.mxu0 0.0
    %1067 = vmatpush.msra.mxu0 0.0
    %1068 = vmatpush.msra.mxu0 0.0
    %1069 = vmatpush.msra.mxu0 0.0
    %1070 = vmatpush.msra.mxu0 0.0
    %1071 = vmatpush.msra.mxu0 0.0
    %1072 = vmatpush.msra.mxu0 0.0
    %1073 = vmatpush.msra.mxu0 %v68
    %1074 = vmatpush.msra.mxu0 %v67
    %1075 = vmatpush.msra.mxu0 %v66
    %1076 = vmatpush.msra.mxu0 %v65
    %1077 = vmatmul.f32.gmra.mxu0 %v899
    %v1078 = vpop.f32.mrf.mxu0
    %v1079 = vadd.f32 %v178, %v1078
    %1080 = vdwg.mxu0
    %1081 = vmatpush.msra.mxu0 0.0
    %1082 = vmatpush.msra.mxu0 0.0
    %1083 = vmatpush.msra.mxu0 0.0
    %1084 = vmatpush.msra.mxu0 0.0
    %1085 = vmatpush.msra.mxu0 0.0
    %1086 = vmatpush.msra.mxu0 0.0
    %1087 = vmatpush.msra.mxu0 0.0
    %1088 = vmatpush.msra.mxu0 0.0
    %1089 = vmatpush.msra.mxu0 0.0
    %1090 = vmatpush.msra.mxu0 0.0
    %1091 = vmatpush.msra.mxu0 0.0
    %1092 = vmatpush.msra.mxu0 0.0
    %1093 = vmatpush.msra.mxu0 %v72
    %1094 = vmatpush.msra.mxu0 %v71
    %1095 = vmatpush.msra.mxu0 %v70
    %1096 = vmatpush.msra.mxu0 %v69
    %1097 = vmatmul.f32.gmra.mxu0 %v899
    %v1098 = vpop.f32.mrf.mxu0
    %v1099 = vadd.f32 %v179, %v1098
    %1100 = vdwg.mxu0
    %1101 = vmatpush.msra.mxu0 0.0
    %1102 = vmatpush.msra.mxu0 0.0
    %1103 = vmatpush.msra.mxu0 0.0
    %1104 = vmatpush.msra.mxu0 0.0
    %1105 = vmatpush.msra.mxu0 0.0
    %1106 = vmatpush.msra.mxu0 0.0
    %1107 = vmatpush.msra.mxu0 0.0
    %1108 = vmatpush.msra.mxu0 0.0
    %1109 = vmatpush.msra.mxu0 0.0
    %1110 = vmatpush.msra.mxu0 0.0
    %1111 = vmatpush.msra.mxu0 0.0
    %1112 = vmatpush.msra.mxu0 0.0
    %1113 = vmatpush.msra.mxu0 %v76
    %1114 = vmatpush.msra.mxu0 %v75
    %1115 = vmatpush.msra.mxu0 %v74
    %1116 = vmatpush.msra.mxu0 %v73
    %1117 = vmatmul.f32.gmra.mxu0 %v899
    %v1118 = vpop.f32.mrf.mxu0
    %v1119 = vadd.f32 %v180, %v1118
    %1120 = vdwg.mxu0
    %1121 = vmatpush.msra.mxu0 0.0
    %1122 = vmatpush.msra.mxu0 0.0
    %1123 = vmatpush.msra.mxu0 0.0
    %1124 = vmatpush.msra.mxu0 0.0
    %1125 = vmatpush.msra.mxu0 0.0
    %1126 = vmatpush.msra.mxu0 0.0
    %1127 = vmatpush.msra.mxu0 0.0
    %1128 = vmatpush.msra.mxu0 0.0
    %1129 = vmatpush.msra.mxu0 0.0
    %1130 = vmatpush.msra.mxu0 0.0
    %1131 = vmatpush.msra.mxu0 0.0
    %1132 = vmatpush.msra.mxu0 0.0
    %1133 = vmatpush.msra.mxu0 %v80
    %1134 = vmatpush.msra.mxu0 %v79
    %1135 = vmatpush.msra.mxu0 %v78
    %1136 = vmatpush.msra.mxu0 %v77
    %1137 = vmatmul.f32.gmra.mxu0 %v899
    %v1138 = vpop.f32.mrf.mxu0
    %v1139 = vadd.f32 %v181, %v1138
    %1140 = vdwg.mxu0
    %v1142 = vsel %vm437, %v919, 0
    %v1145 = vsel %vm437, %v999, 0
    %1147 = vmatpush.xpose.msra.mxu0 0.0
    %1148 = vmatpush.xpose.msra.mxu0 0.0
    %1149 = vmatpush.xpose.msra.mxu0 0.0
    %1150 = vmatpush.xpose.msra.mxu0 0.0
    %1151 = vmatpush.xpose.msra.mxu0 0.0
    %1152 = vmatpush.xpose.msra.mxu0 0.0
    %1153 = vmatpush.xpose.msra.mxu0 0.0
    %1154 = vmatpush.xpose.msra.mxu0 0.0
    %1155 = vmatpush.xpose.msra.mxu0 0.0
    %1156 = vmatpush.xpose.msra.mxu0 0.0
    %1157 = vmatpush.xpose.msra.mxu0 0.0
    %1158 = vmatpush.xpose.msra.mxu0 0.0
    %1159 = vmatpush.xpose.msra.mxu0 0.0
    %1160 = vmatpush.xpose.msra.mxu0 0.0
    %1161 = vmatpush.xpose.msra.mxu0 0.0
    %1162 = vmatpush.xpose.msra.mxu0 %v1145
    %1163 = vmatmul.f32.gmra.mxu0 %v1142
    %v1164 = vpop.f32.mrf.mxu0
    %v1165 = vadd.f32 0.0, %v1164
    %1166 = vdwg.mxu0
    %v1168 = vsel %vm437, %v939, 0
    %v1171 = vsel %vm437, %v1019, 0
    %1173 = vmatpush.xpose.msra.mxu0 0.0
    %1174 = vmatpush.xpose.msra.mxu0 0.0
    %1175 = vmatpush.xpose.msra.mxu0 0.0
    %1176 = vmatpush.xpose.msra.mxu0 0.0
    %1177 = vmatpush.xpose.msra.mxu0 0.0
    %1178 = vmatpush.xpose.msra.mxu0 0.0
    %1179 = vmatpush.xpose.msra.mxu0 0.0
    %1180 = vmatpush.xpose.msra.mxu0 0.0
    %1181 = vmatpush.xpose.msra.mxu0 0.0
    %1182 = vmatpush.xpose.msra.mxu0 0.0
    %1183 = vmatpush.xpose.msra.mxu0 0.0
    %1184 = vmatpush.xpose.msra.mxu0 0.0
    %1185 = vmatpush.xpose.msra.mxu0 0.0
    %1186 = vmatpush.xpose.msra.mxu0 0.0
    %1187 = vmatpush.xpose.msra.mxu0 0.0
    %1188 = vmatpush.xpose.msra.mxu0 %v1171
    %1189 = vmatmul.f32.gmra.mxu0 %v1168
    %v1190 = vpop.f32.mrf.mxu0
    %v1191 = vadd.f32 0.0, %v1190
    %1192 = vdwg.mxu0
    %v1194 = vsel %vm437, %v959, 0
    %v1197 = vsel %vm437, %v1039, 0
    %1199 = vmatpush.xpose.msra.mxu0 0.0
    %1200 = vmatpush.xpose.msra.mxu0 0.0
    %1201 = vmatpush.xpose.msra.mxu0 0.0
    %1202 = vmatpush.xpose.msra.mxu0 0.0
    %1203 = vmatpush.xpose.msra.mxu0 0.0
    %1204 = vmatpush.xpose.msra.mxu0 0.0
    %1205 = vmatpush.xpose.msra.mxu0 0.0
    %1206 = vmatpush.xpose.msra.mxu0 0.0
    %1207 = vmatpush.xpose.msra.mxu0 0.0
    %1208 = vmatpush.xpose.msra.mxu0 0.0
    %1209 = vmatpush.xpose.msra.mxu0 0.0
    %1210 = vmatpush.xpose.msra.mxu0 0.0
    %1211 = vmatpush.xpose.msra.mxu0 0.0
    %1212 = vmatpush.xpose.msra.mxu0 0.0
    %1213 = vmatpush.xpose.msra.mxu0 0.0
    %1214 = vmatpush.xpose.msra.mxu0 %v1197
    %1215 = vmatmul.f32.gmra.mxu0 %v1194
    %v1216 = vpop.f32.mrf.mxu0
    %v1217 = vadd.f32 0.0, %v1216
    %1218 = vdwg.mxu0
    %v1220 = vsel %vm437, %v979, 0
    %v1223 = vsel %vm437, %v1059, 0
    %1225 = vmatpush.xpose.msra.mxu0 0.0
    %1226 = vmatpush.xpose.msra.mxu0 0.0
    %1227 = vmatpush.xpose.msra.mxu0 0.0
    %1228 = vmatpush.xpose.msra.mxu0 0.0
    %1229 = vmatpush.xpose.msra.mxu0 0.0
    %1230 = vmatpush.xpose.msra.mxu0 0.0
    %1231 = vmatpush.xpose.msra.mxu0 0.0
    %1232 = vmatpush.xpose.msra.mxu0 0.0
    %1233 = vmatpush.xpose.msra.mxu0 0.0
    %1234 = vmatpush.xpose.msra.mxu0 0.0
    %1235 = vmatpush.xpose.msra.mxu0 0.0
    %1236 = vmatpush.xpose.msra.mxu0 0.0
    %1237 = vmatpush.xpose.msra.mxu0 0.0
    %1238 = vmatpush.xpose.msra.mxu0 0.0
    %1239 = vmatpush.xpose.msra.mxu0 0.0
    %1240 = vmatpush.xpose.msra.mxu0 %v1223
    %1241 = vmatmul.f32.gmra.mxu0 %v1220
    %v1242 = vpop.f32.mrf.mxu0
    %v1243 = vadd.f32 0.0, %v1242
    %1244 = vdwg.mxu0
    %v1245 = vmul.f32 %v1165, 0.35355338
    %v1246 = vmul.f32 %v1191, 0.35355338
    %v1247 = vmul.f32 %v1217, 0.35355338
    %v1248 = vmul.f32 %v1243, 0.35355338
    %v1249 = vsel %vm437, %v1245, -inf
    %1250 = vmax.xlane.f32.xlu0 %v1249
    %v1251 = vpop.xlane.xlu0 %1250
    %v1252 = vsel %vm437, %v1246, -inf
    %1253 = vmax.xlane.f32.xlu0 %v1252
    %v1254 = vpop.xlane.xlu0 %1253
    %v1255 = vsel %vm437, %v1247, -inf
    %1256 = vmax.xlane.f32.xlu0 %v1255
    %v1257 = vpop.xlane.xlu0 %1256
    %v1258 = vsel %vm437, %v1248, -inf
    %1259 = vmax.xlane.f32.xlu0 %v1258
    %v1260 = vpop.xlane.xlu0 %1259
    %v1261 = vsub.f32 %v1245, %v1251
    %v1262 = vsub.f32 %v1246, %v1254
    %v1263 = vsub.f32 %v1247, %v1257
    %v1264 = vsub.f32 %v1248, %v1260
    %v1265 = vmul.f32 %v1261, 1.442695
    %v1266 = vpow.pop %v1265
    %v1267 = vmul.f32 %v1262, 1.442695
    %v1268 = vpow.pop %v1267
    %v1269 = vmul.f32 %v1263, 1.442695
    %v1270 = vpow.pop %v1269
    %v1271 = vmul.f32 %v1264, 1.442695
    %v1272 = vpow.pop %v1271
    %v1273 = vsel %vm437, %v1266, 0.0
    %1274 = vadd.xlane.f32.xlu0 %v1273
    %v1275 = vpop.xlane.xlu0 %1274
    %v1276 = vsel %vm437, %v1268, 0.0
    %1277 = vadd.xlane.f32.xlu0 %v1276
    %v1278 = vpop.xlane.xlu0 %1277
    %v1279 = vsel %vm437, %v1270, 0.0
    %1280 = vadd.xlane.f32.xlu0 %v1279
    %v1281 = vpop.xlane.xlu0 %1280
    %v1282 = vsel %vm437, %v1272, 0.0
    %1283 = vadd.xlane.f32.xlu0 %v1282
    %v1284 = vpop.xlane.xlu0 %1283
    %v1285 = vrcp.pop %v1275
    %v1286 = vrcp.pop %v1278
    %v1287 = vrcp.pop %v1281
    %v1288 = vrcp.pop %v1284
    %v1289 = vmul.f32 %v1266, %v1285
    %v1290 = vmul.f32 %v1268, %v1286
    %v1291 = vmul.f32 %v1270, %v1287
    %v1292 = vmul.f32 %v1272, %v1288
    %v1294 = vsel %vm437, %v1289, 0
    %1296 = vmatpush.msra.mxu0 0.0
    %1297 = vmatpush.msra.mxu0 0.0
    %1298 = vmatpush.msra.mxu0 0.0
    %1299 = vmatpush.msra.mxu0 0.0
    %1300 = vmatpush.msra.mxu0 0.0
    %1301 = vmatpush.msra.mxu0 0.0
    %1302 = vmatpush.msra.mxu0 0.0
    %1303 = vmatpush.msra.mxu0 0.0
    %1304 = vmatpush.msra.mxu0 0.0
    %1305 = vmatpush.msra.mxu0 0.0
    %1306 = vmatpush.msra.mxu0 0.0
    %1307 = vmatpush.msra.mxu0 0.0
    %1308 = vmatpush.msra.mxu0 0.0
    %1309 = vmatpush.msra.mxu0 0.0
    %1310 = vmatpush.msra.mxu0 0.0
    %1311 = vmatpush.msra.mxu0 %v1079
    %1312 = vmatmul.f32.gmra.mxu0 %v1294
    %v1313 = vpop.f32.mrf.mxu0
    %v1314 = vadd.f32 0.0, %v1313
    %1315 = vdwg.mxu0
    %v1317 = vsel %vm437, %v1290, 0
    %1319 = vmatpush.msra.mxu0 0.0
    %1320 = vmatpush.msra.mxu0 0.0
    %1321 = vmatpush.msra.mxu0 0.0
    %1322 = vmatpush.msra.mxu0 0.0
    %1323 = vmatpush.msra.mxu0 0.0
    %1324 = vmatpush.msra.mxu0 0.0
    %1325 = vmatpush.msra.mxu0 0.0
    %1326 = vmatpush.msra.mxu0 0.0
    %1327 = vmatpush.msra.mxu0 0.0
    %1328 = vmatpush.msra.mxu0 0.0
    %1329 = vmatpush.msra.mxu0 0.0
    %1330 = vmatpush.msra.mxu0 0.0
    %1331 = vmatpush.msra.mxu0 0.0
    %1332 = vmatpush.msra.mxu0 0.0
    %1333 = vmatpush.msra.mxu0 0.0
    %1334 = vmatpush.msra.mxu0 %v1099
    %1335 = vmatmul.f32.gmra.mxu0 %v1317
    %v1336 = vpop.f32.mrf.mxu0
    %v1337 = vadd.f32 0.0, %v1336
    %1338 = vdwg.mxu0
    %v1340 = vsel %vm437, %v1291, 0
    %1342 = vmatpush.msra.mxu0 0.0
    %1343 = vmatpush.msra.mxu0 0.0
    %1344 = vmatpush.msra.mxu0 0.0
    %1345 = vmatpush.msra.mxu0 0.0
    %1346 = vmatpush.msra.mxu0 0.0
    %1347 = vmatpush.msra.mxu0 0.0
    %1348 = vmatpush.msra.mxu0 0.0
    %1349 = vmatpush.msra.mxu0 0.0
    %1350 = vmatpush.msra.mxu0 0.0
    %1351 = vmatpush.msra.mxu0 0.0
    %1352 = vmatpush.msra.mxu0 0.0
    %1353 = vmatpush.msra.mxu0 0.0
    %1354 = vmatpush.msra.mxu0 0.0
    %1355 = vmatpush.msra.mxu0 0.0
    %1356 = vmatpush.msra.mxu0 0.0
    %1357 = vmatpush.msra.mxu0 %v1119
    %1358 = vmatmul.f32.gmra.mxu0 %v1340
    %v1359 = vpop.f32.mrf.mxu0
    %v1360 = vadd.f32 0.0, %v1359
    %1361 = vdwg.mxu0
    %v1363 = vsel %vm437, %v1292, 0
    %1365 = vmatpush.msra.mxu0 0.0
    %1366 = vmatpush.msra.mxu0 0.0
    %1367 = vmatpush.msra.mxu0 0.0
    %1368 = vmatpush.msra.mxu0 0.0
    %1369 = vmatpush.msra.mxu0 0.0
    %1370 = vmatpush.msra.mxu0 0.0
    %1371 = vmatpush.msra.mxu0 0.0
    %1372 = vmatpush.msra.mxu0 0.0
    %1373 = vmatpush.msra.mxu0 0.0
    %1374 = vmatpush.msra.mxu0 0.0
    %1375 = vmatpush.msra.mxu0 0.0
    %1376 = vmatpush.msra.mxu0 0.0
    %1377 = vmatpush.msra.mxu0 0.0
    %1378 = vmatpush.msra.mxu0 0.0
    %1379 = vmatpush.msra.mxu0 0.0
    %1380 = vmatpush.msra.mxu0 %v1139
    %1381 = vmatmul.f32.gmra.mxu0 %v1363
    %v1382 = vpop.f32.mrf.mxu0
    %v1383 = vadd.f32 0.0, %v1382
    %1384 = vdwg.mxu0
    %v1386 = vsel %vm437, %v1314, 0
    %1388 = vmatpush.msra.mxu0 0.0
    %1389 = vmatpush.msra.mxu0 0.0
    %1390 = vmatpush.msra.mxu0 0.0
    %1391 = vmatpush.msra.mxu0 0.0
    %1392 = vmatpush.msra.mxu0 0.0
    %1393 = vmatpush.msra.mxu0 0.0
    %1394 = vmatpush.msra.mxu0 0.0
    %1395 = vmatpush.msra.mxu0 0.0
    %1396 = vmatpush.msra.mxu0 0.0
    %1397 = vmatpush.msra.mxu0 0.0
    %1398 = vmatpush.msra.mxu0 0.0
    %1399 = vmatpush.msra.mxu0 0.0
    %1400 = vmatpush.msra.mxu0 0.0
    %1401 = vmatpush.msra.mxu0 0.0
    %1402 = vmatpush.msra.mxu0 0.0
    %1403 = vmatpush.msra.mxu0 %v93
    %1404 = vmatmul.f32.gmra.mxu0 %v1386
    %v1405 = vpop.f32.mrf.mxu0
    %v1406 = vadd.f32 0.0, %v1405
    %1407 = vdwg.mxu0
    %v1409 = vsel %vm437, %v1337, 0
    %1411 = vmatpush.msra.mxu0 0.0
    %1412 = vmatpush.msra.mxu0 0.0
    %1413 = vmatpush.msra.mxu0 0.0
    %1414 = vmatpush.msra.mxu0 0.0
    %1415 = vmatpush.msra.mxu0 0.0
    %1416 = vmatpush.msra.mxu0 0.0
    %1417 = vmatpush.msra.mxu0 0.0
    %1418 = vmatpush.msra.mxu0 0.0
    %1419 = vmatpush.msra.mxu0 0.0
    %1420 = vmatpush.msra.mxu0 0.0
    %1421 = vmatpush.msra.mxu0 0.0
    %1422 = vmatpush.msra.mxu0 0.0
    %1423 = vmatpush.msra.mxu0 0.0
    %1424 = vmatpush.msra.mxu0 0.0
    %1425 = vmatpush.msra.mxu0 0.0
    %1426 = vmatpush.msra.mxu0 %v94
    %1427 = vmatmul.f32.gmra.mxu0 %v1409
    %v1428 = vpop.f32.mrf.mxu0
    %v1429 = vadd.f32 0.0, %v1428
    %1430 = vdwg.mxu0
    %v1432 = vsel %vm437, %v1360, 0
    %1434 = vmatpush.msra.mxu0 0.0
    %1435 = vmatpush.msra.mxu0 0.0
    %1436 = vmatpush.msra.mxu0 0.0
    %1437 = vmatpush.msra.mxu0 0.0
    %1438 = vmatpush.msra.mxu0 0.0
    %1439 = vmatpush.msra.mxu0 0.0
    %1440 = vmatpush.msra.mxu0 0.0
    %1441 = vmatpush.msra.mxu0 0.0
    %1442 = vmatpush.msra.mxu0 0.0
    %1443 = vmatpush.msra.mxu0 0.0
    %1444 = vmatpush.msra.mxu0 0.0
    %1445 = vmatpush.msra.mxu0 0.0
    %1446 = vmatpush.msra.mxu0 0.0
    %1447 = vmatpush.msra.mxu0 0.0
    %1448 = vmatpush.msra.mxu0 0.0
    %1449 = vmatpush.msra.mxu0 %v95
    %1450 = vmatmul.f32.gmra.mxu0 %v1432
    %v1451 = vpop.f32.mrf.mxu0
    %v1452 = vadd.f32 0.0, %v1451
    %1453 = vdwg.mxu0
    %v1455 = vsel %vm437, %v1383, 0
    %1457 = vmatpush.msra.mxu0 0.0
    %1458 = vmatpush.msra.mxu0 0.0
    %1459 = vmatpush.msra.mxu0 0.0
    %1460 = vmatpush.msra.mxu0 0.0
    %1461 = vmatpush.msra.mxu0 0.0
    %1462 = vmatpush.msra.mxu0 0.0
    %1463 = vmatpush.msra.mxu0 0.0
    %1464 = vmatpush.msra.mxu0 0.0
    %1465 = vmatpush.msra.mxu0 0.0
    %1466 = vmatpush.msra.mxu0 0.0
    %1467 = vmatpush.msra.mxu0 0.0
    %1468 = vmatpush.msra.mxu0 0.0
    %1469 = vmatpush.msra.mxu0 0.0
    %1470 = vmatpush.msra.mxu0 0.0
    %1471 = vmatpush.msra.mxu0 0.0
    %1472 = vmatpush.msra.mxu0 %v96
    %1473 = vmatmul.f32.gmra.mxu0 %v1455
    %v1474 = vpop.f32.mrf.mxu0
    %v1475 = vadd.f32 0.0, %v1474
    %1476 = vdwg.mxu0
    %v1477 = vsel %vm121, %v1406, 0.0
    %v1478 = vsel %vm121, %v1429, 0.0
    %v1479 = vadd.f32 %v1477, %v1478
    %v1480 = vsel %vm121, %v1452, 0.0
    %v1481 = vadd.f32 %v1479, %v1480
    %v1482 = vsel %vm121, %v1475, 0.0
    %v1483 = vadd.f32 %v1481, %v1482
    %v1484 = vadd.f32 %v1483, %v782
    %v1485 = vadd.f32 %v868, %v1484
    %v1486 = vsel %vm121, %v1485, 0.0
    %v1487 = vrot.slane %v1486, 4
    %v1488 = vadd.f32 %v1486, %v1487
    %v1489 = vrot.slane %v1488, 2
    %v1490 = vadd.f32 %v1488, %v1489
    %v1491 = vrot.slane %v1490, 1
    %v1492 = vadd.f32 %v1490, %v1491
    %v1493 = vmul.f32 %v1492, %v135
    %v1494 = vsub.f32 %v1485, %v1493
    %v1495 = vmul.f32 %v1494, %v1494
    %v1496 = vsel %vm121, %v1495, 0.0
    %v1497 = vrot.slane %v1496, 4
    %v1498 = vadd.f32 %v1496, %v1497
    %v1499 = vrot.slane %v1498, 2
    %v1500 = vadd.f32 %v1498, %v1499
    %v1501 = vrot.slane %v1500, 1
    %v1502 = vadd.f32 %v1500, %v1501
    %v1503 = vmul.f32 %v1502, 0.14285715
    %v1504 = vrsqrt.pop %v1503
    %v1505 = vmul.f32 %v1504, %v1503
    %v1506 = vmul.f32 %v1505, %v1504
    %v1507 = vmul.f32 0.5, %v1506
    %v1508 = vsub.f32 1.5, %v1507
    %v1509 = vmul.f32 %v1504, %v1508
    %vm1510 = vweird.f32 %v1503
    %vm1511 = vweird.f32 %v1504
    %vm1512 = vmor %vm1510, %vm1511
    %v1513 = vsel %vm1512, %v1504, %v1509
    %v1514 = vmul.f32 %v1494, %v1513
    %v1516 = vsel %vm121, %v1514, 0
    %1518 = vmatpush.msra.mxu0 0.0
    %1519 = vmatpush.msra.mxu0 0.0
    %1520 = vmatpush.msra.mxu0 0.0
    %1521 = vmatpush.msra.mxu0 0.0
    %1522 = vmatpush.msra.mxu0 0.0
    %1523 = vmatpush.msra.mxu0 0.0
    %1524 = vmatpush.msra.mxu0 0.0
    %1525 = vmatpush.msra.mxu0 0.0
    %1526 = vmatpush.msra.mxu0 0.0
    %1527 = vmatpush.msra.mxu0 0.0
    %1528 = vmatpush.msra.mxu0 0.0
    %1529 = vmatpush.msra.mxu0 0.0
    %1530 = vmatpush.msra.mxu0 %v101
    %1531 = vmatpush.msra.mxu0 %v100
    %1532 = vmatpush.msra.mxu0 %v99
    %1533 = vmatpush.msra.mxu0 %v98
    %1534 = vmatmul.f32.gmra.mxu0 %v1516
    %v1535 = vpop.f32.mrf.mxu0
    %v1536 = vadd.f32 %v816, %v1535
    %1537 = vdwg.mxu0
    %v1538 = vmax.f32 %v1536, 0.0
    %1539 = vmatpush.msra.mxu0 %v118
    %1540 = vmatpush.msra.mxu0 %v117
    %1541 = vmatpush.msra.mxu0 %v116
    %1542 = vmatpush.msra.mxu0 %v115
    %1543 = vmatpush.msra.mxu0 %v114
    %1544 = vmatpush.msra.mxu0 %v113
    %1545 = vmatpush.msra.mxu0 %v112
    %1546 = vmatpush.msra.mxu0 %v111
    %1547 = vmatpush.msra.mxu0 %v110
    %1548 = vmatpush.msra.mxu0 %v109
    %1549 = vmatpush.msra.mxu0 %v108
    %1550 = vmatpush.msra.mxu0 %v107
    %1551 = vmatpush.msra.mxu0 %v106
    %1552 = vmatpush.msra.mxu0 %v105
    %1553 = vmatpush.msra.mxu0 %v104
    %1554 = vmatpush.msra.mxu0 %v103
    %1555 = vmatmul.f32.gmra.mxu0 %v1538
    %v1556 = vpop.f32.mrf.mxu0
    %v1557 = vadd.f32 %v843, %v1556
    %1558 = vdwg.mxu0
    %v1559 = vadd.f32 %v1485, %v1557
    %s1560 = scalar_lea.vmem [#allocation2], 8
    %1561 = vst.msk [vmem:[%s1560] sm:$0xff] %vm121, %v1559
    // Predicated region
    $region38: #{tpu_custom_call.1} parent=1 // pred_check
      _
    $region39: #{tpu_custom_call.1} parent=1 // pred_check_branch
      %1563 = sbr.rel (0) target = $region41
    $region40: #{tpu_custom_call.1} parent=1 // pred_region
      %1565 = vsyncadd [#allocation3], 0
      %s1566 = sshll.u32 [#allocation2], 4
      %s1567 = int_to_ptr.vmem [resolvable:$true] %s1566
      %s1568 = sshll.u32 %s9, 4
      %s1569 = int_to_ptr.hbm [resolvable:$true] %s1568
      %1574 = dma.vmem_to_hbm [thread:$0]  %s1567, 256, %s1569, [#allocation3], 128, 128, 8
    $region41: #{tpu_custom_call.1} parent=1 // pred_fallthru
      _
    // Predicated region
    $region42: #{tpu_custom_call.1} parent=1 // pred_check
      _
    $region43: #{tpu_custom_call.1} parent=1 // pred_check_branch
      %1576 = sbr.rel (0) target = $region45
    $region44: #{tpu_custom_call.1} parent=1 // pred_region
      %1578 = dma.done [#allocation3], 256
    $region45: #{tpu_custom_call.1} parent=1 // pred_fallthru
      _
    %1579 = vsyncpa [#allocation3], 1

</llo_original>
